<compile_context>
chip_gen: v5e
topology: v5e:2x2
jax: 0.10.0
libtpu: 0.0.40
codegen_flags: <defaults>
</compile_context>

<pallas_src>
import functools

import jax
import jax.numpy as jnp
from jax.experimental import pallas as pl
from jax.experimental.pallas import tpu as pltpu

LANE = 128


def _round_up(x, m):
    return ((x + m - 1) // m) * m


def _pick_tile(n, candidates):
    for c in candidates:
        if c <= n and n % c == 0:
            return c
    return n


def _vmem_limit_bytes(required):
    """Clamp the scoped-VMEM request to the current chip's physical VMEM."""
    try:
        cap = int(pltpu.get_tpu_info().vmem_capacity_bytes)
    except Exception:
        cap = 64 * 1024 * 1024          # conservative fallback (v7x per-TC VMEM)
    headroom = 8 * 1024 * 1024          # Mosaic internal scratch
    limit = int(required * 1.25) + (8 << 20)
    return max(24 << 20, min(limit, cap - headroom))


def fused_graph_sage_kernel(adj_ref, x0_ref, w_ref, b_ref, out_ref,
                            act_a, act_b, acc_ref):
    """Fused multi-layer SAGEConv.  Grid = (num_layers, row_tiles, k_tiles).

    adj_ref : (tile_m, tile_k)    bf16  streamed tile of row-normalized adjacency
    x0_ref  : (n_pad, f_pad)      bf16  VMEM-resident padded input features
    w_ref   : (2L, f_pad, f_pad)  bf16  stacked weights: [2l]=W_l^T, [2l+1]=W_r^T
    b_ref   : (L, 1, f_pad)       f32   biases
    out_ref : (tile_m, f_pad)     f32   output row tile (written by last layer only)
    act_a/b : (n_pad, f_pad)      bf16  ping-pong activation scratch
    acc_ref : (tile_m, f_pad)     f32   neighbor-aggregation accumulator (K axis)
    """
    layer_id = pl.program_id(0)
    tile_id = pl.program_id(1)
    k_id = pl.program_id(2)
    num_layers = pl.num_programs(0)
    num_k = pl.num_programs(2)
    tile_m, tile_k = adj_ref.shape

    @pl.when(k_id == 0)
    def _():
        acc_ref[...] = jnp.zeros_like(acc_ref)

    k0 = pl.multiple_of(k_id * tile_k, tile_k)
    row0 = pl.multiple_of(tile_id * tile_m, tile_m)

    def step(src_ref, dst_ref):
        # partial mean-neighbor aggregation: (tile_m, tile_k) @ (tile_k, f_pad)
        acc_ref[...] += jnp.dot(adj_ref[...], src_ref[pl.ds(k0, tile_k), :],
                                preferred_element_type=jnp.float32)

        @pl.when(k_id == num_k - 1)
        def _finalize():
            # Two K=f_pad MXU matmuls instead of concat + one K=2*f_pad matmul.
            x_tile = src_ref[pl.ds(row0, tile_m), :]
            out = jnp.dot(acc_ref[...].astype(jnp.bfloat16), w_ref[2 * layer_id],
                          preferred_element_type=jnp.float32)
            out = out + jnp.dot(x_tile, w_ref[2 * layer_id + 1],
                                preferred_element_type=jnp.float32)
            out = out + b_ref[layer_id]

            @pl.when(layer_id < num_layers - 1)
            def _():
                # relu (dropout = identity in eval mode); only non-last layers
                # feed the activation scratch.
                dst_ref[pl.ds(row0, tile_m), :] = (
                    jnp.maximum(out, 0.0).astype(dst_ref.dtype))

            @pl.when(layer_id == num_layers - 1)
            def _():
                # Only the last layer stores the output tile (no dead vst work).
                out_ref[...] = out.astype(out_ref.dtype)

    # Layer 0 reads the VMEM-resident input features directly (no seed copy);
    # later layers ping-pong between act_a / act_b.
    @pl.when(layer_id == 0)
    def _():
        step(x0_ref, act_a)

    @pl.when(layer_id % 2 == 1)
    def _():
        step(act_a, act_b)

    @pl.when(jnp.logical_and(layer_id > 0, layer_id % 2 == 0))
    def _():
        step(act_b, act_a)


def build_norm_adjacency(edge_index, num_nodes, n_pad):
    """Dense row-normalized adjacency: adj[dst, src] = 1 / in_degree(dst)."""
    src, dst = edge_index[0], edge_index[1]
    adj = jnp.zeros((n_pad, n_pad), jnp.float32)
    adj = adj.at[dst, src].add(1.0)
    deg = jnp.sum(adj, axis=1, keepdims=True)
    return adj / jnp.maximum(deg, 1.0)


def pack_params(params, f_pad):
    """Stack per-layer [W_l^T, W_r^T] zero-padded to (f_pad, f_pad); pad biases."""
    w_stack, b_stack = [], []
    for (w_l, w_r, b) in params:
        out_c, in_c = w_l.shape
        w_stack.append(jnp.zeros((f_pad, f_pad), jnp.float32).at[:in_c, :out_c].set(w_l.T))
        w_stack.append(jnp.zeros((f_pad, f_pad), jnp.float32).at[:in_c, :out_c].set(w_r.T))
        b_stack.append(jnp.zeros((1, f_pad), jnp.float32).at[0, :out_c].set(b))
    w = jnp.stack(w_stack).astype(jnp.bfloat16)   # (2L, f_pad, f_pad)
    b = jnp.stack(b_stack)                        # (L, 1, f_pad) f32
    return w, b


def init_sage_conv_params(key, in_channels, out_channels):
    """PyG SAGEConv: lin_l (bias=True) on aggregated neighbors, lin_r (bias=False) on root."""
    k1, k2, k3 = jax.random.split(key, 3)
    scale = 1.0 / jnp.sqrt(jnp.float32(in_channels))
    w_l = jax.random.uniform(k1, (out_channels, in_channels), jnp.float32, -scale, scale)
    w_r = jax.random.uniform(k2, (out_channels, in_channels), jnp.float32, -scale, scale)
    b = jax.random.uniform(k3, (out_channels,), jnp.float32, -scale, scale)
    return w_l, w_r, b


@functools.partial(jax.jit, static_argnames=("tile_m", "tile_k"))
def graph_sage_forward(params, x, edge_index, *, tile_m=None, tile_k=None):
    num_nodes, in_c = x.shape
    out_c = params[-1][0].shape[0]
    num_layers = len(params)

    # pad node count / channel dims to lane-dense multiples of 128
    n_pad = _round_up(num_nodes, LANE)
    f_pad = _round_up(max(max(w_l.shape) for (w_l, _, _) in params), LANE)

    # Large row tiles amortize the ~0.35us/step grid overhead; K-tiling keeps
    # the streamed adjacency block independent of graph size.
    if tile_m is None:
        tile_m = _pick_tile(n_pad, (512, 256, 128))
    if tile_k is None:
        tile_k = _pick_tile(n_pad, (2048, 1024, 512, 256, 128))

    adj = build_norm_adjacency(edge_index, num_nodes, n_pad).astype(jnp.bfloat16)
    x0 = (jnp.zeros((n_pad, f_pad), jnp.bfloat16)
          .at[:num_nodes, :in_c].set(x.astype(jnp.bfloat16)))
    w, b = pack_params(params, f_pad)

    vmem_required = (
        2 * tile_m * tile_k * 2                 # adj stream (double-buffered, bf16)
        + n_pad * f_pad * 2                     # x0 (resident, single copy)
        + 2 * num_layers * f_pad * f_pad * 2    # stacked weights (resident)
        + num_layers * f_pad * 4                # biases (resident)
        + 2 * tile_m * f_pad * 4                # out tile (double-buffered, f32)
        + 2 * n_pad * f_pad * 2                 # activation ping-pong scratch
        + tile_m * f_pad * 4                    # aggregation accumulator
    )

    out_padded = pl.pallas_call(
        fused_graph_sage_kernel,
        out_shape=jax.ShapeDtypeStruct((n_pad, f_pad), jnp.float32),
        grid_spec=pltpu.PrefetchScalarGridSpec(
            num_scalar_prefetch=0,
            grid=(num_layers, n_pad // tile_m, n_pad // tile_k),
            in_specs=[
                # streamed adjacency tile (double-buffered by the pipeline)
                pl.BlockSpec((tile_m, tile_k), lambda l, i, k: (i, k)),
                # constant operands: whole-array VMEM residents (single copy)
                pl.BlockSpec(memory_space=pltpu.MemorySpace.VMEM),   # x0
                pl.BlockSpec(memory_space=pltpu.MemorySpace.VMEM),   # weights
                pl.BlockSpec(memory_space=pltpu.MemorySpace.VMEM),   # biases
            ],
            out_specs=pl.BlockSpec((tile_m, f_pad), lambda l, i, k: (i, 0)),
            scratch_shapes=[
                pltpu.VMEM((n_pad, f_pad), jnp.bfloat16),   # activation ping
                pltpu.VMEM((n_pad, f_pad), jnp.bfloat16),   # activation pong
                pltpu.VMEM((tile_m, f_pad), jnp.float32),   # agg accumulator
            ],
        ),
        compiler_params=pltpu.CompilerParams(
            # All axes sequential: layer l+1 depends on ALL rows of layer l via
            # the resident activation scratch; megacore sharding would break it.
            dimension_semantics=("arbitrary", "arbitrary", "arbitrary"),
            vmem_limit_bytes=_vmem_limit_bytes(vmem_required),
        ),
    )(adj, x0, w, b)

    return out_padded[:num_nodes, :out_c]


def graph_sage_reference(params, x, edge_index):
    """Pure-JAX f32 reference of the same forward (for a loose sanity check)."""
    num_nodes = x.shape[0]
    adj = build_norm_adjacency(edge_index, num_nodes, num_nodes)
    h = x
    for li, (w_l, w_r, b) in enumerate(params):
        h_new = (adj @ h) @ w_l.T + h @ w_r.T + b
        h = jnp.maximum(h_new, 0.0) if li < len(params) - 1 else h_new
    return h


if __name__ == "__main__":
    key = jax.random.PRNGKey(0)

    num_nodes = 64
    num_edges = 256
    in_channels, hidden_channels, out_channels = 16, 32, 8

    k_x, k_e, k_p = jax.random.split(key, 3)
    x = jax.random.normal(k_x, (num_nodes, in_channels), jnp.float32)
    edge_index = jax.random.randint(k_e, (2, num_edges), 0, num_nodes, jnp.int32)

    kp1, kp2, kp3 = jax.random.split(k_p, 3)
    params = [
        init_sage_conv_params(kp1, in_channels, hidden_channels),
        init_sage_conv_params(kp2, hidden_channels, hidden_channels),
        init_sage_conv_params(kp3, hidden_channels, out_channels),
    ]

    out = graph_sage_forward(params, x, edge_index)
    jax.block_until_ready(out)
    assert out.shape == (num_nodes, out_channels)

    # loose sanity check vs. an f32 reference (kernel runs bf16 with f32 accumulation)
    ref = graph_sage_reference(params, x, edge_index)
    assert jnp.allclose(out, ref, atol=0.15, rtol=0.1), float(jnp.max(jnp.abs(out - ref)))

    print("KERNEL_OK")
</pallas_src>

<mosaic_0001>
module attributes {stable_mosaic.version = 11 : i64} {
  func.func @fused_graph_sage_kernel(%arg0: i32, %arg1: i32, %arg2: i32, %arg3: memref<128x128xbf16, #tpu.memory_space<vmem>>, %arg4: memref<128x128xbf16, #tpu.memory_space<vmem>>, %arg5: memref<6x128x128xbf16, #tpu.memory_space<vmem>>, %arg6: memref<3x1x128xf32, #tpu.memory_space<vmem>>, %arg7: memref<128x128xf32, #tpu.memory_space<vmem>>, %arg8: memref<128x128xbf16, #tpu.memory_space<vmem>>, %arg9: memref<128x128xbf16, #tpu.memory_space<vmem>>, %arg10: memref<128x128xf32, #tpu.memory_space<vmem>>) attributes {dimension_semantics = [#tpu.dimension_semantics<arbitrary>, #tpu.dimension_semantics<arbitrary>, #tpu.dimension_semantics<arbitrary>], iteration_bounds = array<i64: 3, 1, 1>, scalar_prefetch = 0 : i64, scratch_operands = 3 : i64, tpu.core_type = #tpu.core_type<tc>, window_params = [{transform_indices = @transform_0, window_bounds = array<i64: 128, 128>}, {pipeline_mode = #tpu.pipeline_mode<synchronous>, transform_indices = @transform_1, window_bounds = array<i64: 128, 128>}, {pipeline_mode = #tpu.pipeline_mode<synchronous>, transform_indices = @transform_2, window_bounds = array<i64: 6, 128, 128>}, {pipeline_mode = #tpu.pipeline_mode<synchronous>, transform_indices = @transform_3, window_bounds = array<i64: 3, 1, 128>}, {transform_indices = @transform_4, window_bounds = array<i64: 128, 128>}]} {
    %c0_i32 = arith.constant 0 : i32
    %0 = arith.cmpi eq, %arg2, %c0_i32 : i32
    %1 = arith.extui %0 : i1 to i32
    %c0_i32_0 = arith.constant 0 : i32
    %2 = arith.cmpi ne, %1, %c0_i32_0 : i32
    scf.if %2 {
      %cst = arith.constant 0.000000e+00 : f32
      %38 = vector.broadcast %cst : f32 to vector<128x128xf32>
      %c0 = arith.constant 0 : index
      %c0_19 = arith.constant 0 : index
      %39 = vector.load %arg10[%c0, %c0_19] : memref<128x128xf32, #tpu.memory_space<vmem>>, vector<128x128xf32>
      tpu.vector_store %arg10[%c0, %c0_19], %38 {strides = array<i32>} : memref<128x128xf32, #tpu.memory_space<vmem>>, vector<128x128xf32>,
    } else {
    }
    %c128_i32 = arith.constant 128 : i32
    %3 = arith.muli %arg2, %c128_i32 : i32
    %4 = tpu.assume_multiple %3, 128 : i32
    %c128_i32_1 = arith.constant 128 : i32
    %5 = arith.muli %arg1, %c128_i32_1 : i32
    %6 = tpu.assume_multiple %5, 128 : i32
    %c0_i32_2 = arith.constant 0 : i32
    %7 = arith.cmpi eq, %arg0, %c0_i32_2 : i32
    %8 = arith.extui %7 : i1 to i32
    %c0_i32_3 = arith.constant 0 : i32
    %9 = arith.cmpi ne, %8, %c0_i32_3 : i32
    scf.if %9 {
      %c0 = arith.constant 0 : index
      %c0_19 = arith.constant 0 : index
      %38 = vector.load %arg10[%c0, %c0_19] : memref<128x128xf32, #tpu.memory_space<vmem>>, vector<128x128xf32>
      %c0_20 = arith.constant 0 : index
      %c0_21 = arith.constant 0 : index
      %39 = vector.load %arg3[%c0_20, %c0_21] : memref<128x128xbf16, #tpu.memory_space<vmem>>, vector<128x128xbf16>
      %40 = arith.index_cast %4 : i32 to index
      %c0_22 = arith.constant 0 : index
      %41 = vector.load %arg4[%40, %c0_22] : memref<128x128xbf16, #tpu.memory_space<vmem>>, vector<128x128xbf16>
      %cst = arith.constant dense<0.000000e+00> : vector<128x128xf32>
      %42 = tpu.matmul %39, %41, %cst {dimension_numbers = #tpu.dot_dimension_numbers<[1], [0], [0], [1], [0, 0, 1, 1], [], []>} : vector<128x128xbf16>, vector<128x128xbf16>, vector<128x128xf32> -> vector<128x128xf32>
      %43 = arith.addf %38, %42 : vector<128x128xf32>
      %c0_23 = arith.constant 0 : index
      %c0_24 = arith.constant 0 : index
      %44 = vector.load %arg10[%c0_23, %c0_24] : memref<128x128xf32, #tpu.memory_space<vmem>>, vector<128x128xf32>
      tpu.vector_store %arg10[%c0_23, %c0_24], %43 {strides = array<i32>} : memref<128x128xf32, #tpu.memory_space<vmem>>, vector<128x128xf32>,
      %c0_i32_25 = arith.constant 0 : i32
      %45 = arith.cmpi eq, %arg2, %c0_i32_25 : i32
      %46 = arith.extui %45 : i1 to i32
      %c0_i32_26 = arith.constant 0 : i32
      %47 = arith.cmpi ne, %46, %c0_i32_26 : i32
      scf.if %47 {
        %48 = arith.index_cast %6 : i32 to index
        %c0_27 = arith.constant 0 : index
        %49 = vector.load %arg4[%48, %c0_27] : memref<128x128xbf16, #tpu.memory_space<vmem>>, vector<128x128xbf16>
        %c0_28 = arith.constant 0 : index
        %c0_29 = arith.constant 0 : index
        %50 = vector.load %arg10[%c0_28, %c0_29] : memref<128x128xf32, #tpu.memory_space<vmem>>, vector<128x128xf32>
        %51 = arith.truncf %50 : vector<128x128xf32> to vector<128x128xbf16>
        %c2_i32_30 = arith.constant 2 : i32
        %52 = arith.muli %c2_i32_30, %arg0 : i32
        %53 = arith.index_cast %52 : i32 to index
        %c0_31 = arith.constant 0 : index
        %c0_32 = arith.constant 0 : index
        %54 = vector.load %arg5[%53, %c0_31, %c0_32] : memref<6x128x128xbf16, #tpu.memory_space<vmem>>, vector<1x128x128xbf16>
        %55 = vector.shape_cast %54 : vector<1x128x128xbf16> to vector<128x128xbf16>
        %cst_33 = arith.constant dense<0.000000e+00> : vector<128x128xf32>
        %56 = tpu.matmul %51, %55, %cst_33 {dimension_numbers = #tpu.dot_dimension_numbers<[1], [0], [0], [1], [0, 0, 1, 1], [], []>} : vector<128x128xbf16>, vector<128x128xbf16>, vector<128x128xf32> -> vector<128x128xf32>
        %c2_i32_34 = arith.constant 2 : i32
        %57 = arith.muli %c2_i32_34, %arg0 : i32
        %c1_i32_35 = arith.constant 1 : i32
        %58 = arith.addi %57, %c1_i32_35 : i32
        %59 = arith.index_cast %58 : i32 to index
        %c0_36 = arith.constant 0 : index
        %c0_37 = arith.constant 0 : index
        %60 = vector.load %arg5[%59, %c0_36, %c0_37] : memref<6x128x128xbf16, #tpu.memory_space<vmem>>, vector<1x128x128xbf16>
        %61 = vector.shape_cast %60 : vector<1x128x128xbf16> to vector<128x128xbf16>
        %cst_38 = arith.constant dense<0.000000e+00> : vector<128x128xf32>
        %62 = tpu.matmul %49, %61, %cst_38 {dimension_numbers = #tpu.dot_dimension_numbers<[1], [0], [0], [1], [0, 0, 1, 1], [], []>} : vector<128x128xbf16>, vector<128x128xbf16>, vector<128x128xf32> -> vector<128x128xf32>
        %63 = arith.addf %56, %62 : vector<128x128xf32>
        %64 = arith.index_cast %arg0 : i32 to index
        %c0_39 = arith.constant 0 : index
        %c0_40 = arith.constant 0 : index
        %65 = vector.load %arg6[%64, %c0_39, %c0_40] : memref<3x1x128xf32, #tpu.memory_space<vmem>>, vector<1x1x128xf32>
        %66 = vector.shape_cast %65 : vector<1x1x128xf32> to vector<1x128xf32>
        %67 = vector.broadcast %66 : vector<1x128xf32> to vector<128x128xf32>
        %68 = arith.addf %63, %67 : vector<128x128xf32>
        %c2_i32_41 = arith.constant 2 : i32
        %69 = arith.cmpi slt, %arg0, %c2_i32_41 : i32
        %70 = arith.extui %69 : i1 to i32
        %c0_i32_42 = arith.constant 0 : i32
        %71 = arith.cmpi ne, %70, %c0_i32_42 : i32
        scf.if %71 {
          %cst_45 = arith.constant 0.000000e+00 : f32
          %75 = vector.broadcast %cst_45 : f32 to vector<128x128xf32>
          %76 = arith.maximumf %68, %75 : vector<128x128xf32>
          %77 = arith.truncf %76 : vector<128x128xf32> to vector<128x128xbf16>
          %78 = arith.index_cast %6 : i32 to index
          %c0_46 = arith.constant 0 : index
          %79 = vector.load %arg8[%78, %c0_46] : memref<128x128xbf16, #tpu.memory_space<vmem>>, vector<128x128xbf16>
          tpu.vector_store %arg8[%78, %c0_46], %77 {strides = array<i32>} : memref<128x128xbf16, #tpu.memory_space<vmem>>, vector<128x128xbf16>,
        } else {
        }
        %c2_i32_43 = arith.constant 2 : i32
        %72 = arith.cmpi eq, %arg0, %c2_i32_43 : i32
        %73 = arith.extui %72 : i1 to i32
        %c0_i32_44 = arith.constant 0 : i32
        %74 = arith.cmpi ne, %73, %c0_i32_44 : i32
        scf.if %74 {
          %c0_45 = arith.constant 0 : index
          %c0_46 = arith.constant 0 : index
          %75 = vector.load %arg7[%c0_45, %c0_46] : memref<128x128xf32, #tpu.memory_space<vmem>>, vector<128x128xf32>
          tpu.vector_store %arg7[%c0_45, %c0_46], %68 {strides = array<i32>} : memref<128x128xf32, #tpu.memory_space<vmem>>, vector<128x128xf32>,
        } else {
        }
      } else {
      }
    } else {
    }
    %c2_i32 = arith.constant 2 : i32
    %c0_i32_4 = arith.constant 0 : i32
    %10 = arith.cmpi eq, %c2_i32, %c0_i32_4 : i32
    %c1_i32 = arith.constant 1 : i32
    %11 = arith.select %10, %c1_i32, %c2_i32 : i32
    %12 = arith.remsi %arg0, %11 : i32
    %c0_i32_5 = arith.constant 0 : i32
    %13 = arith.cmpi ne, %12, %c0_i32_5 : i32
    %c0_i32_6 = arith.constant 0 : i32
    %14 = arith.cmpi slt, %12, %c0_i32_6 : i32
    %c0_i32_7 = arith.constant 0 : i32
    %15 = arith.cmpi slt, %11, %c0_i32_7 : i32
    %16 = arith.xori %14, %15 : i1
    %17 = arith.andi %16, %13 : i1
    %18 = arith.addi %12, %11 : i32
    %19 = arith.select %17, %18, %12 : i32
    %c1_i32_8 = arith.constant 1 : i32
    %20 = arith.cmpi eq, %19, %c1_i32_8 : i32
    %21 = arith.extui %20 : i1 to i32
    %c0_i32_9 = arith.constant 0 : i32
    %22 = arith.cmpi ne, %21, %c0_i32_9 : i32
    scf.if %22 {
      %c0 = arith.constant 0 : index
      %c0_19 = arith.constant 0 : index
      %38 = vector.load %arg10[%c0, %c0_19] : memref<128x128xf32, #tpu.memory_space<vmem>>, vector<128x128xf32>
      %c0_20 = arith.constant 0 : index
      %c0_21 = arith.constant 0 : index
      %39 = vector.load %arg3[%c0_20, %c0_21] : memref<128x128xbf16, #tpu.memory_space<vmem>>, vector<128x128xbf16>
      %40 = arith.index_cast %4 : i32 to index
      %c0_22 = arith.constant 0 : index
      %41 = vector.load %arg8[%40, %c0_22] : memref<128x128xbf16, #tpu.memory_space<vmem>>, vector<128x128xbf16>
      %cst = arith.constant dense<0.000000e+00> : vector<128x128xf32>
      %42 = tpu.matmul %39, %41, %cst {dimension_numbers = #tpu.dot_dimension_numbers<[1], [0], [0], [1], [0, 0, 1, 1], [], []>} : vector<128x128xbf16>, vector<128x128xbf16>, vector<128x128xf32> -> vector<128x128xf32>
      %43 = arith.addf %38, %42 : vector<128x128xf32>
      %c0_23 = arith.constant 0 : index
      %c0_24 = arith.constant 0 : index
      %44 = vector.load %arg10[%c0_23, %c0_24] : memref<128x128xf32, #tpu.memory_space<vmem>>, vector<128x128xf32>
      tpu.vector_store %arg10[%c0_23, %c0_24], %43 {strides = array<i32>} : memref<128x128xf32, #tpu.memory_space<vmem>>, vector<128x128xf32>,
      %c0_i32_25 = arith.constant 0 : i32
      %45 = arith.cmpi eq, %arg2, %c0_i32_25 : i32
      %46 = arith.extui %45 : i1 to i32
      %c0_i32_26 = arith.constant 0 : i32
      %47 = arith.cmpi ne, %46, %c0_i32_26 : i32
      scf.if %47 {
        %48 = arith.index_cast %6 : i32 to index
        %c0_27 = arith.constant 0 : index
        %49 = vector.load %arg8[%48, %c0_27] : memref<128x128xbf16, #tpu.memory_space<vmem>>, vector<128x128xbf16>
        %c0_28 = arith.constant 0 : index
        %c0_29 = arith.constant 0 : index
        %50 = vector.load %arg10[%c0_28, %c0_29] : memref<128x128xf32, #tpu.memory_space<vmem>>, vector<128x128xf32>
        %51 = arith.truncf %50 : vector<128x128xf32> to vector<128x128xbf16>
        %c2_i32_30 = arith.constant 2 : i32
        %52 = arith.muli %c2_i32_30, %arg0 : i32
        %53 = arith.index_cast %52 : i32 to index
        %c0_31 = arith.constant 0 : index
        %c0_32 = arith.constant 0 : index
        %54 = vector.load %arg5[%53, %c0_31, %c0_32] : memref<6x128x128xbf16, #tpu.memory_space<vmem>>, vector<1x128x128xbf16>
        %55 = vector.shape_cast %54 : vector<1x128x128xbf16> to vector<128x128xbf16>
        %cst_33 = arith.constant dense<0.000000e+00> : vector<128x128xf32>
        %56 = tpu.matmul %51, %55, %cst_33 {dimension_numbers = #tpu.dot_dimension_numbers<[1], [0], [0], [1], [0, 0, 1, 1], [], []>} : vector<128x128xbf16>, vector<128x128xbf16>, vector<128x128xf32> -> vector<128x128xf32>
        %c2_i32_34 = arith.constant 2 : i32
        %57 = arith.muli %c2_i32_34, %arg0 : i32
        %c1_i32_35 = arith.constant 1 : i32
        %58 = arith.addi %57, %c1_i32_35 : i32
        %59 = arith.index_cast %58 : i32 to index
        %c0_36 = arith.constant 0 : index
        %c0_37 = arith.constant 0 : index
        %60 = vector.load %arg5[%59, %c0_36, %c0_37] : memref<6x128x128xbf16, #tpu.memory_space<vmem>>, vector<1x128x128xbf16>
        %61 = vector.shape_cast %60 : vector<1x128x128xbf16> to vector<128x128xbf16>
        %cst_38 = arith.constant dense<0.000000e+00> : vector<128x128xf32>
        %62 = tpu.matmul %49, %61, %cst_38 {dimension_numbers = #tpu.dot_dimension_numbers<[1], [0], [0], [1], [0, 0, 1, 1], [], []>} : vector<128x128xbf16>, vector<128x128xbf16>, vector<128x128xf32> -> vector<128x128xf32>
        %63 = arith.addf %56, %62 : vector<128x128xf32>
        %64 = arith.index_cast %arg0 : i32 to index
        %c0_39 = arith.constant 0 : index
        %c0_40 = arith.constant 0 : index
        %65 = vector.load %arg6[%64, %c0_39, %c0_40] : memref<3x1x128xf32, #tpu.memory_space<vmem>>, vector<1x1x128xf32>
        %66 = vector.shape_cast %65 : vector<1x1x128xf32> to vector<1x128xf32>
        %67 = vector.broadcast %66 : vector<1x128xf32> to vector<128x128xf32>
        %68 = arith.addf %63, %67 : vector<128x128xf32>
        %c2_i32_41 = arith.constant 2 : i32
        %69 = arith.cmpi slt, %arg0, %c2_i32_41 : i32
        %70 = arith.extui %69 : i1 to i32
        %c0_i32_42 = arith.constant 0 : i32
        %71 = arith.cmpi ne, %70, %c0_i32_42 : i32
        scf.if %71 {
          %cst_45 = arith.constant 0.000000e+00 : f32
          %75 = vector.broadcast %cst_45 : f32 to vector<128x128xf32>
          %76 = arith.maximumf %68, %75 : vector<128x128xf32>
          %77 = arith.truncf %76 : vector<128x128xf32> to vector<128x128xbf16>
          %78 = arith.index_cast %6 : i32 to index
          %c0_46 = arith.constant 0 : index
          %79 = vector.load %arg9[%78, %c0_46] : memref<128x128xbf16, #tpu.memory_space<vmem>>, vector<128x128xbf16>
          tpu.vector_store %arg9[%78, %c0_46], %77 {strides = array<i32>} : memref<128x128xbf16, #tpu.memory_space<vmem>>, vector<128x128xbf16>,
        } else {
        }
        %c2_i32_43 = arith.constant 2 : i32
        %72 = arith.cmpi eq, %arg0, %c2_i32_43 : i32
        %73 = arith.extui %72 : i1 to i32
        %c0_i32_44 = arith.constant 0 : i32
        %74 = arith.cmpi ne, %73, %c0_i32_44 : i32
        scf.if %74 {
          %c0_45 = arith.constant 0 : index
          %c0_46 = arith.constant 0 : index
          %75 = vector.load %arg7[%c0_45, %c0_46] : memref<128x128xf32, #tpu.memory_space<vmem>>, vector<128x128xf32>
          tpu.vector_store %arg7[%c0_45, %c0_46], %68 {strides = array<i32>} : memref<128x128xf32, #tpu.memory_space<vmem>>, vector<128x128xf32>,
        } else {
        }
      } else {
      }
    } else {
    }
    %c0_i32_10 = arith.constant 0 : i32
    %23 = arith.cmpi sgt, %arg0, %c0_i32_10 : i32
    %c2_i32_11 = arith.constant 2 : i32
    %c0_i32_12 = arith.constant 0 : i32
    %24 = arith.cmpi eq, %c2_i32_11, %c0_i32_12 : i32
    %c1_i32_13 = arith.constant 1 : i32
    %25 = arith.select %24, %c1_i32_13, %c2_i32_11 : i32
    %26 = arith.remsi %arg0, %25 : i32
    %c0_i32_14 = arith.constant 0 : i32
    %27 = arith.cmpi ne, %26, %c0_i32_14 : i32
    %c0_i32_15 = arith.constant 0 : i32
    %28 = arith.cmpi slt, %26, %c0_i32_15 : i32
    %c0_i32_16 = arith.constant 0 : i32
    %29 = arith.cmpi slt, %25, %c0_i32_16 : i32
    %30 = arith.xori %28, %29 : i1
    %31 = arith.andi %30, %27 : i1
    %32 = arith.addi %26, %25 : i32
    %33 = arith.select %31, %32, %26 : i32
    %c0_i32_17 = arith.constant 0 : i32
    %34 = arith.cmpi eq, %33, %c0_i32_17 : i32
    %35 = arith.andi %23, %34 : i1
    %36 = arith.extui %35 : i1 to i32
    %c0_i32_18 = arith.constant 0 : i32
    %37 = arith.cmpi ne, %36, %c0_i32_18 : i32
    scf.if %37 {
      %c0 = arith.constant 0 : index
      %c0_19 = arith.constant 0 : index
      %38 = vector.load %arg10[%c0, %c0_19] : memref<128x128xf32, #tpu.memory_space<vmem>>, vector<128x128xf32>
      %c0_20 = arith.constant 0 : index
      %c0_21 = arith.constant 0 : index
      %39 = vector.load %arg3[%c0_20, %c0_21] : memref<128x128xbf16, #tpu.memory_space<vmem>>, vector<128x128xbf16>
      %40 = arith.index_cast %4 : i32 to index
      %c0_22 = arith.constant 0 : index
      %41 = vector.load %arg9[%40, %c0_22] : memref<128x128xbf16, #tpu.memory_space<vmem>>, vector<128x128xbf16>
      %cst = arith.constant dense<0.000000e+00> : vector<128x128xf32>
      %42 = tpu.matmul %39, %41, %cst {dimension_numbers = #tpu.dot_dimension_numbers<[1], [0], [0], [1], [0, 0, 1, 1], [], []>} : vector<128x128xbf16>, vector<128x128xbf16>, vector<128x128xf32> -> vector<128x128xf32>
      %43 = arith.addf %38, %42 : vector<128x128xf32>
      %c0_23 = arith.constant 0 : index
      %c0_24 = arith.constant 0 : index
      %44 = vector.load %arg10[%c0_23, %c0_24] : memref<128x128xf32, #tpu.memory_space<vmem>>, vector<128x128xf32>
      tpu.vector_store %arg10[%c0_23, %c0_24], %43 {strides = array<i32>} : memref<128x128xf32, #tpu.memory_space<vmem>>, vector<128x128xf32>,
      %c0_i32_25 = arith.constant 0 : i32
      %45 = arith.cmpi eq, %arg2, %c0_i32_25 : i32
      %46 = arith.extui %45 : i1 to i32
      %c0_i32_26 = arith.constant 0 : i32
      %47 = arith.cmpi ne, %46, %c0_i32_26 : i32
      scf.if %47 {
        %48 = arith.index_cast %6 : i32 to index
        %c0_27 = arith.constant 0 : index
        %49 = vector.load %arg9[%48, %c0_27] : memref<128x128xbf16, #tpu.memory_space<vmem>>, vector<128x128xbf16>
        %c0_28 = arith.constant 0 : index
        %c0_29 = arith.constant 0 : index
        %50 = vector.load %arg10[%c0_28, %c0_29] : memref<128x128xf32, #tpu.memory_space<vmem>>, vector<128x128xf32>
        %51 = arith.truncf %50 : vector<128x128xf32> to vector<128x128xbf16>
        %c2_i32_30 = arith.constant 2 : i32
        %52 = arith.muli %c2_i32_30, %arg0 : i32
        %53 = arith.index_cast %52 : i32 to index
        %c0_31 = arith.constant 0 : index
        %c0_32 = arith.constant 0 : index
        %54 = vector.load %arg5[%53, %c0_31, %c0_32] : memref<6x128x128xbf16, #tpu.memory_space<vmem>>, vector<1x128x128xbf16>
        %55 = vector.shape_cast %54 : vector<1x128x128xbf16> to vector<128x128xbf16>
        %cst_33 = arith.constant dense<0.000000e+00> : vector<128x128xf32>
        %56 = tpu.matmul %51, %55, %cst_33 {dimension_numbers = #tpu.dot_dimension_numbers<[1], [0], [0], [1], [0, 0, 1, 1], [], []>} : vector<128x128xbf16>, vector<128x128xbf16>, vector<128x128xf32> -> vector<128x128xf32>
        %c2_i32_34 = arith.constant 2 : i32
        %57 = arith.muli %c2_i32_34, %arg0 : i32
        %c1_i32_35 = arith.constant 1 : i32
        %58 = arith.addi %57, %c1_i32_35 : i32
        %59 = arith.index_cast %58 : i32 to index
        %c0_36 = arith.constant 0 : index
        %c0_37 = arith.constant 0 : index
        %60 = vector.load %arg5[%59, %c0_36, %c0_37] : memref<6x128x128xbf16, #tpu.memory_space<vmem>>, vector<1x128x128xbf16>
        %61 = vector.shape_cast %60 : vector<1x128x128xbf16> to vector<128x128xbf16>
        %cst_38 = arith.constant dense<0.000000e+00> : vector<128x128xf32>
        %62 = tpu.matmul %49, %61, %cst_38 {dimension_numbers = #tpu.dot_dimension_numbers<[1], [0], [0], [1], [0, 0, 1, 1], [], []>} : vector<128x128xbf16>, vector<128x128xbf16>, vector<128x128xf32> -> vector<128x128xf32>
        %63 = arith.addf %56, %62 : vector<128x128xf32>
        %64 = arith.index_cast %arg0 : i32 to index
        %c0_39 = arith.constant 0 : index
        %c0_40 = arith.constant 0 : index
        %65 = vector.load %arg6[%64, %c0_39, %c0_40] : memref<3x1x128xf32, #tpu.memory_space<vmem>>, vector<1x1x128xf32>
        %66 = vector.shape_cast %65 : vector<1x1x128xf32> to vector<1x128xf32>
        %67 = vector.broadcast %66 : vector<1x128xf32> to vector<128x128xf32>
        %68 = arith.addf %63, %67 : vector<128x128xf32>
        %c2_i32_41 = arith.constant 2 : i32
        %69 = arith.cmpi slt, %arg0, %c2_i32_41 : i32
        %70 = arith.extui %69 : i1 to i32
        %c0_i32_42 = arith.constant 0 : i32
        %71 = arith.cmpi ne, %70, %c0_i32_42 : i32
        scf.if %71 {
          %cst_45 = arith.constant 0.000000e+00 : f32
          %75 = vector.broadcast %cst_45 : f32 to vector<128x128xf32>
          %76 = arith.maximumf %68, %75 : vector<128x128xf32>
          %77 = arith.truncf %76 : vector<128x128xf32> to vector<128x128xbf16>
          %78 = arith.index_cast %6 : i32 to index
          %c0_46 = arith.constant 0 : index
          %79 = vector.load %arg8[%78, %c0_46] : memref<128x128xbf16, #tpu.memory_space<vmem>>, vector<128x128xbf16>
          tpu.vector_store %arg8[%78, %c0_46], %77 {strides = array<i32>} : memref<128x128xbf16, #tpu.memory_space<vmem>>, vector<128x128xbf16>,
        } else {
        }
        %c2_i32_43 = arith.constant 2 : i32
        %72 = arith.cmpi eq, %arg0, %c2_i32_43 : i32
        %73 = arith.extui %72 : i1 to i32
        %c0_i32_44 = arith.constant 0 : i32
        %74 = arith.cmpi ne, %73, %c0_i32_44 : i32
        scf.if %74 {
          %c0_45 = arith.constant 0 : index
          %c0_46 = arith.constant 0 : index
          %75 = vector.load %arg7[%c0_45, %c0_46] : memref<128x128xf32, #tpu.memory_space<vmem>>, vector<128x128xf32>
          tpu.vector_store %arg7[%c0_45, %c0_46], %68 {strides = array<i32>} : memref<128x128xf32, #tpu.memory_space<vmem>>, vector<128x128xf32>,
        } else {
        }
      } else {
      }
    } else {
    }
    return
  }
  func.func @transform_0(%arg0: i32, %arg1: i32, %arg2: i32) -> (i32, i32) {
    %c0_i32 = arith.constant 0 : i32
    return %arg1, %arg2 : i32, i32
  }
  func.func @transform_1(%arg0: i32, %arg1: i32, %arg2: i32) -> (i32, i32) {
    %c0_i32 = arith.constant 0 : i32
    %c0_i32_0 = arith.constant 0 : i32
    %c0_i32_1 = arith.constant 0 : i32
    return %c0_i32, %c0_i32_0 : i32, i32
  }
  func.func @transform_2(%arg0: i32, %arg1: i32, %arg2: i32) -> (i32, i32, i32) {
    %c0_i32 = arith.constant 0 : i32
    %c0_i32_0 = arith.constant 0 : i32
    %c0_i32_1 = arith.constant 0 : i32
    %c0_i32_2 = arith.constant 0 : i32
    return %c0_i32, %c0_i32_0, %c0_i32_1 : i32, i32, i32
  }
  func.func @transform_3(%arg0: i32, %arg1: i32, %arg2: i32) -> (i32, i32, i32) {
    %c0_i32 = arith.constant 0 : i32
    %c0_i32_0 = arith.constant 0 : i32
    %c0_i32_1 = arith.constant 0 : i32
    %c0_i32_2 = arith.constant 0 : i32
    return %c0_i32, %c0_i32_0, %c0_i32_1 : i32, i32, i32
  }
  func.func @transform_4(%arg0: i32, %arg1: i32, %arg2: i32) -> (i32, i32) {
    %c0_i32 = arith.constant 0 : i32
    %c0_i32_0 = arith.constant 0 : i32
    return %arg1, %c0_i32 : i32, i32
  }
}

</mosaic_0001>

<llo_original>
// kernel: graph_sage_forward.1
$region0: #{graph_sage_forward.1}
  #allocation0 [shape = 'u32[]', space=smem, size = 0x4, offset = 0x4, fixed_abs, tag = 'smem constant byte address 0x4 - core index']
  #allocation1 [shape = 'u32[72,128]{1,0:T(1,128)}', space=vmem, size = 0x9000, scoped, tag = 'internal scratch']
  #allocation2 [shape = 'bf16[128,128]{1,0:T(8,128)(2,1)}', space=vmem, size = 0x8000, scoped, tag = 'scratch operand']
  #allocation3 [shape = 'bf16[128,128]{1,0:T(8,128)(2,1)}', space=vmem, size = 0x8000, scoped, tag = 'scratch operand']
  #allocation4 [shape = 'f32[128,128]{1,0:T(8,128)}', space=vmem, size = 0x10000, scoped, tag = 'scratch operand']
  %s0 = inlined_call_operand.vmem [shape: bf16[128,128], index: 0, kind: input, shape index: {}]
  %s1 = inlined_call_operand.vmem [shape: bf16[128,128], index: 1, kind: input, shape index: {}]
  %s2 = inlined_call_operand.vmem [shape: bf16[6,128,128], index: 2, kind: input, shape index: {}]
  %s3 = inlined_call_operand.vmem [shape: f32[3,1,128], index: 3, kind: input, shape index: {}]
  %s4 = inlined_call_operand.vmem [shape: f32[128,128], index: 4, kind: output, shape index: {}]
  %s5 = sld [smem:[#allocation0]]
  $region101: #{graph_sage_forward.1} parent=0
    _
  %s7 = ssub.s32 1, %s5
  %s8 = scalar_select 0, %s7, %s5
  loop: start=0, step=1, limit=5
  $region2: #{graph_sage_forward.1} parent=0 // loop_pre_header
    _
  $region3: #{graph_sage_forward.1} parent=0 // loop_header
    %s10 = sphi 0, %s14
    %p11 = scmp.ge.s32.totalorder %s10, 5
    %s17 = sphi 0, %s36
    %s18 = sphi 0, %s32
    %s19 = sphi 0, %s28
    %s20 = sphi 0, %s17
    %s21 = sphi 0, %s18
    %s22 = sphi 0, %s19
    %s23 = sphi 0, %s20
    %s24 = sphi 0, %s21
    %s25 = sphi 0, %s22
    %s41 = sphi 0, %s43
    %s44 = sphi 0, %s41
    %s45 = sphi 0, %s44
    %s61 = sphi 0, %s45
    %s65 = sphi 0, %s65
    %s67 = sphi 0, %s65
    %s68 = sphi 0, %s67
    %s82 = sphi 0, %s68
    %s86 = sphi 0, %s86
    %s88 = sphi 0, %s86
    %s89 = sphi 0, %s88
    %s103 = sphi 0, %s89
    %s107 = sphi 0, %s107
    %s109 = sphi 0, %s107
    %s110 = sphi 0, %s109
    %s124 = sphi 0, %s110
    %s130 = sphi 0, %s132
    %s133 = sphi 0, %s130
    %s134 = sphi 0, %s133
    %s150 = sphi 0, %s134
  $region4: #{graph_sage_forward.1} parent=0 // loop_header_branch
    %13 = sbr.rel (%p11) target = $region8
  $region5: #{graph_sage_forward.1} parent=0 // loop_body
    %s15 = ssub.s32 %s10, 1
    %s16 = ssub.s32 %s10, 2
    %s26 = sadd.s32 1, %s19
    %p27 = scmp.ge.s32.totalorder %s26, 1
    %s28 = scalar_select %p27, 0, %s26
    %s29 = sadd.s32 1, %s18
    %s30 = scalar_select %p27, %s29, %s18
    %p31 = scmp.ge.s32.totalorder %s30, 1
    %s32 = scalar_select %p31, 0, %s30
    %s33 = sadd.s32 1, %s17
    %s34 = scalar_select %p31, %s33, %s17
    %p35 = scmp.ge.s32.totalorder %s34, 3
    %s36 = scalar_select %p35, 0, %s34
    %s37 = ssub.s32 %s18, %s32
    %s38 = ssub.s32 %s19, %s28
    %s39 = sor.u32 %s37, %s38
    %p40 = scmp.eq.s32.totalorder %s39, 0
    %s42 = sadd.s32 %s41, 1
    %s43 = scalar_select %p40, %s41, %s42
    %p46 = pneg %p40
    %p47 = scmp.eq.s32.totalorder %s10, 2
    %p48 = por %p46, %p47
    %p49 = scmp.ne.s32.totalorder %s41, %s44
    %p50 = scmp.eq.s32.totalorder %s10, 0
    %p51 = por %p49, %p50
    %p52 = scmp.ne.s32.totalorder %s41, %s44
    %p53 = scmp.eq.s32.totalorder %s15, 2
    %p54 = por %p52, %p53
    %p55 = scmp.ne.s32.totalorder %s44, %s45
    %p56 = scmp.eq.s32.totalorder %s15, 0
    %p57 = por %p55, %p56
    %p58 = scmp.ne.s32.totalorder %s44, %s45
    %p59 = scmp.eq.s32.totalorder %s16, 2
    %p60 = por %p58, %p59
    %p62 = scmp.ne.s32.totalorder %s45, %s61
    %p63 = scmp.eq.s32.totalorder %s16, 0
    %p64 = por %p62, %p63
    %s66 = sadd.s32 %s65, 1
    %p69 = scmp.eq.s32.totalorder %s10, 2
    %p70 = scmp.ne.s32.totalorder %s65, %s67
    %p71 = scmp.eq.s32.totalorder %s10, 0
    %p72 = por %p70, %p71
    %p73 = scmp.ne.s32.totalorder %s65, %s67
    %p74 = scmp.eq.s32.totalorder %s15, 2
    %p75 = por %p73, %p74
    %p76 = scmp.ne.s32.totalorder %s67, %s68
    %p77 = scmp.eq.s32.totalorder %s15, 0
    %p78 = por %p76, %p77
    %p79 = scmp.ne.s32.totalorder %s67, %s68
    %p80 = scmp.eq.s32.totalorder %s16, 2
    %p81 = por %p79, %p80
    %p83 = scmp.ne.s32.totalorder %s68, %s82
    %p84 = scmp.eq.s32.totalorder %s16, 0
    %p85 = por %p83, %p84
    %s87 = sadd.s32 %s86, 1
    %p90 = scmp.eq.s32.totalorder %s10, 2
    %p91 = scmp.ne.s32.totalorder %s86, %s88
    %p92 = scmp.eq.s32.totalorder %s10, 0
    %p93 = por %p91, %p92
    %p94 = scmp.ne.s32.totalorder %s86, %s88
    %p95 = scmp.eq.s32.totalorder %s15, 2
    %p96 = por %p94, %p95
    %p97 = scmp.ne.s32.totalorder %s88, %s89
    %p98 = scmp.eq.s32.totalorder %s15, 0
    %p99 = por %p97, %p98
    %p100 = scmp.ne.s32.totalorder %s88, %s89
    %p101 = scmp.eq.s32.totalorder %s16, 2
    %p102 = por %p100, %p101
    %p104 = scmp.ne.s32.totalorder %s89, %s103
    %p105 = scmp.eq.s32.totalorder %s16, 0
    %p106 = por %p104, %p105
    %s108 = sadd.s32 %s107, 1
    %p111 = scmp.eq.s32.totalorder %s10, 2
    %p112 = scmp.ne.s32.totalorder %s107, %s109
    %p113 = scmp.eq.s32.totalorder %s10, 0
    %p114 = por %p112, %p113
    %p115 = scmp.ne.s32.totalorder %s107, %s109
    %p116 = scmp.eq.s32.totalorder %s15, 2
    %p117 = por %p115, %p116
    %p118 = scmp.ne.s32.totalorder %s109, %s110
    %p119 = scmp.eq.s32.totalorder %s15, 0
    %p120 = por %p118, %p119
    %p121 = scmp.ne.s32.totalorder %s109, %s110
    %p122 = scmp.eq.s32.totalorder %s16, 2
    %p123 = por %p121, %p122
    %p125 = scmp.ne.s32.totalorder %s110, %s124
    %p126 = scmp.eq.s32.totalorder %s16, 0
    %p127 = por %p125, %p126
    %s128 = ssub.s32 %s18, %s32
    %p129 = scmp.eq.s32.totalorder %s128, 0
    %s131 = sadd.s32 %s130, 1
    %s132 = scalar_select %p129, %s130, %s131
    %p135 = pneg %p129
    %p136 = scmp.eq.s32.totalorder %s10, 2
    %p137 = por %p135, %p136
    %p138 = scmp.ne.s32.totalorder %s130, %s133
    %p139 = scmp.eq.s32.totalorder %s10, 0
    %p140 = por %p138, %p139
    %p141 = scmp.ne.s32.totalorder %s130, %s133
    %p142 = scmp.eq.s32.totalorder %s15, 2
    %p143 = por %p141, %p142
    %p144 = scmp.ne.s32.totalorder %s133, %s134
    %p145 = scmp.eq.s32.totalorder %s15, 0
    %p146 = por %p144, %p145
    %p147 = scmp.ne.s32.totalorder %s133, %s134
    %p148 = scmp.eq.s32.totalorder %s16, 2
    %p149 = por %p147, %p148
    %p151 = scmp.ne.s32.totalorder %s134, %s150
    %p152 = scmp.eq.s32.totalorder %s16, 0
    %p153 = por %p151, %p152
    %p154 = scmp.le.s32.totalorder 1, %s10
    %p155 = scmp.lt.s32.totalorder %s10, 4
    %p156 = pnand %p154, %p155
    %p157 = pneg %p156
    // Predicated region
    $region9: #{graph_sage_forward.1} parent=5 // pred_check
      _
    $region10: #{graph_sage_forward.1} parent=5 // pred_check_branch
      %159 = sbr.rel (%p156) target = $region12
    $region11: #{graph_sage_forward.1} parent=5 // pred_region
      %s160 = ssub.s32 %s10, 1
      // Predicated region
      $region13: #{graph_sage_forward.1} parent=11 // pred_check
        %p161 = pneg %p57
      $region14: #{graph_sage_forward.1} parent=11 // pred_check_branch
        %163 = sbr.rel (%p161) target = $region16
      $region15: #{graph_sage_forward.1} parent=11 // pred_region
        %s164 = smul.u32 16, %s21
        %p165 = scmp.lt.s32.totalorder %s164, 15
        %s166 = scalar_select %p165, %s164, 15
        %p167 = scmp.lt.s32.totalorder %s22, 0
        %s168 = scalar_select %p167, %s22, 0
        %s169 = sadd.s32 %s168, %s166
        %s170 = smul.addr %s169, 4
        %s171 = scalar_lea.vmem %s0, %s170
        %s172 = smul.u32 16, %s21
      $region16: #{graph_sage_forward.1} parent=11 // pred_fallthru
        _
      // Predicated region
      $region17: #{graph_sage_forward.1} parent=11 // pred_check
        %p173 = pneg %p78
      $region18: #{graph_sage_forward.1} parent=11 // pred_check_branch
        %175 = sbr.rel (%p173) target = $region20
      $region19: #{graph_sage_forward.1} parent=11 // pred_region
        _
      $region20: #{graph_sage_forward.1} parent=11 // pred_fallthru
        _
      // Predicated region
      $region21: #{graph_sage_forward.1} parent=11 // pred_check
        %p176 = pneg %p99
      $region22: #{graph_sage_forward.1} parent=11 // pred_check_branch
        %178 = sbr.rel (%p176) target = $region24
      $region23: #{graph_sage_forward.1} parent=11 // pred_region
        _
      $region24: #{graph_sage_forward.1} parent=11 // pred_fallthru
        _
      // Predicated region
      $region25: #{graph_sage_forward.1} parent=11 // pred_check
        %p179 = pneg %p120
      $region26: #{graph_sage_forward.1} parent=11 // pred_check_branch
        %181 = sbr.rel (%p179) target = $region28
      $region27: #{graph_sage_forward.1} parent=11 // pred_region
        _
      $region28: #{graph_sage_forward.1} parent=11 // pred_fallthru
        _
    $region12: #{graph_sage_forward.1} parent=5 // pred_fallthru
      _
    %p182 = scmp.lt.s32.totalorder %s10, 3
    // Predicated region
    $region29: #{graph_sage_forward.1} parent=5 // pred_check
      %p183 = pneg %p182
    $region30: #{graph_sage_forward.1} parent=5 // pred_check_branch
      %185 = sbr.rel (%p183) target = $region32
    $region31: #{graph_sage_forward.1} parent=5 // pred_region
      _
    $region32: #{graph_sage_forward.1} parent=5 // pred_fallthru
      _
    %p186 = scmp.le.s32.totalorder 1, %s10
    %p187 = scmp.lt.s32.totalorder %s10, 4
    %p188 = pnand %p186, %p187
    %p189 = pneg %p188
    // Predicated region
    $region33: #{graph_sage_forward.1} parent=5 // pred_check
      _
    $region34: #{graph_sage_forward.1} parent=5 // pred_check_branch
      %191 = sbr.rel (%p188) target = $region36
    $region35: #{graph_sage_forward.1} parent=5 // pred_region
      %s192 = ssub.s32 %s10, 1
      %s193 = smul.u32 16, %s21
      %p194 = scmp.lt.s32.totalorder %s193, 15
      %s195 = scalar_select %p194, %s193, 15
      %p196 = scmp.lt.s32.totalorder %s22, 0
      %s197 = scalar_select %p196, %s22, 0
      %s198 = sadd.s32 %s197, %s195
      %s199 = smul.addr %s198, 4
      %s200 = scalar_lea.vmem %s0, %s199
      %p201 = pneg %p57
      %p202 = pneg %p54
      %p203 = pneg %p78
      %p204 = pneg %p75
      %p205 = pneg %p99
      %p206 = pneg %p96
      %p207 = pneg %p120
      %p208 = pneg %p117
      %p209 = pneg %p146
      %p210 = pneg %p143
      %s211 = smul.u32 16, %s21
      %p212 = scmp.lt.s32.totalorder %s211, 15
      %s213 = scalar_select %p212, %s211, 15
      %s214 = smul.addr %s213, 8
      %s215 = scalar_lea.vmem %s4, %s214
      %s216 = smul.u32 16, %s21
      %p217 = scmp.lt.s32.totalorder %s216, 15
      %s218 = scalar_select %p217, %s216, 15
      %p219 = scmp.lt.s32.totalorder %s22, 0
      %s220 = scalar_select %p219, %s22, 0
      %s221 = sadd.s32 %s220, %s218
      %s222 = smul.addr %s221, 4
      %s223 = scalar_lea.vmem %s0, %s222
      %s224 = smul.u32 16, %s21
      %s225 = smul.u32 16, %s21
      %p226 = scmp.lt.s32.totalorder %s225, 15
      %s227 = scalar_select %p226, %s225, 15
      %s228 = smul.addr %s227, 8
      %s229 = scalar_lea.vmem %s4, %s228
      %s230 = smul.u32 16, %s21
      %p231 = scmp.eq.s32.totalorder %s22, 0
      // Predicated region
      $region37: #{graph_sage_forward.1} parent=35 // pred_check
        %p232 = pneg %p231
      $region38: #{graph_sage_forward.1} parent=35 // pred_check_branch
        %234 = sbr.rel (%p232) target = $region40
      $region39: #{graph_sage_forward.1} parent=35 // pred_region
        %235 = vst [vmem:[#allocation4] sm:$0xff] 0.0
        %236 = vst [vmem:[#allocation4 + $0x8] sm:$0xff] 0.0
        %237 = vst [vmem:[#allocation4 + $0x10] sm:$0xff] 0.0
        %238 = vst [vmem:[#allocation4 + $0x18] sm:$0xff] 0.0
        %239 = vst [vmem:[#allocation4 + $0x20] sm:$0xff] 0.0
        %240 = vst [vmem:[#allocation4 + $0x28] sm:$0xff] 0.0
        %241 = vst [vmem:[#allocation4 + $0x30] sm:$0xff] 0.0
        %242 = vst [vmem:[#allocation4 + $0x38] sm:$0xff] 0.0
        %243 = vst [vmem:[#allocation4 + $0x40] sm:$0xff] 0.0
        %244 = vst [vmem:[#allocation4 + $0x48] sm:$0xff] 0.0
        %245 = vst [vmem:[#allocation4 + $0x50] sm:$0xff] 0.0
        %246 = vst [vmem:[#allocation4 + $0x58] sm:$0xff] 0.0
        %247 = vst [vmem:[#allocation4 + $0x60] sm:$0xff] 0.0
        %248 = vst [vmem:[#allocation4 + $0x68] sm:$0xff] 0.0
        %249 = vst [vmem:[#allocation4 + $0x70] sm:$0xff] 0.0
        %250 = vst [vmem:[#allocation4 + $0x78] sm:$0xff] 0.0
      $region40: #{graph_sage_forward.1} parent=35 // pred_fallthru
        _
      %s251 = smul.u32 %s22, 128
      %s252 = smul.u32 %s21, 128
      %p253 = scmp.eq.s32.totalorder %s20, 0
      // Predicated region
      $region41: #{graph_sage_forward.1} parent=35 // pred_check
        %p254 = pneg %p253
      $region42: #{graph_sage_forward.1} parent=35 // pred_check_branch
        %256 = sbr.rel (%p254) target = $region44
      $region43: #{graph_sage_forward.1} parent=35 // pred_region
        %v257 = vld [vmem:[#allocation4] sm:$0xff]
        %v258 = vld [vmem:[#allocation4 + $0x8] sm:$0xff]
        %v259 = vld [vmem:[#allocation4 + $0x10] sm:$0xff]
        %v260 = vld [vmem:[#allocation4 + $0x18] sm:$0xff]
        %v261 = vld [vmem:[#allocation4 + $0x20] sm:$0xff]
        %v262 = vld [vmem:[#allocation4 + $0x28] sm:$0xff]
        %v263 = vld [vmem:[#allocation4 + $0x30] sm:$0xff]
        %v264 = vld [vmem:[#allocation4 + $0x38] sm:$0xff]
        %v265 = vld [vmem:[#allocation4 + $0x40] sm:$0xff]
        %v266 = vld [vmem:[#allocation4 + $0x48] sm:$0xff]
        %v267 = vld [vmem:[#allocation4 + $0x50] sm:$0xff]
        %v268 = vld [vmem:[#allocation4 + $0x58] sm:$0xff]
        %v269 = vld [vmem:[#allocation4 + $0x60] sm:$0xff]
        %v270 = vld [vmem:[#allocation4 + $0x68] sm:$0xff]
        %v271 = vld [vmem:[#allocation4 + $0x70] sm:$0xff]
        %v272 = vld [vmem:[#allocation4 + $0x78] sm:$0xff]
        %v273 = vld [vmem:[%s223] sm:$0xf]
        %v274 = vld [vmem:[%s223 + $0x4] sm:$0xf]
        %v275 = vld [vmem:[%s223 + $0x8] sm:$0xf]
        %v276 = vld [vmem:[%s223 + $0xc] sm:$0xf]
        %v277 = vld [vmem:[%s223 + $0x10] sm:$0xf]
        %v278 = vld [vmem:[%s223 + $0x14] sm:$0xf]
        %v279 = vld [vmem:[%s223 + $0x18] sm:$0xf]
        %v280 = vld [vmem:[%s223 + $0x1c] sm:$0xf]
        %v281 = vld [vmem:[%s223 + $0x20] sm:$0xf]
        %v282 = vld [vmem:[%s223 + $0x24] sm:$0xf]
        %v283 = vld [vmem:[%s223 + $0x28] sm:$0xf]
        %v284 = vld [vmem:[%s223 + $0x2c] sm:$0xf]
        %v285 = vld [vmem:[%s223 + $0x30] sm:$0xf]
        %v286 = vld [vmem:[%s223 + $0x34] sm:$0xf]
        %v287 = vld [vmem:[%s223 + $0x38] sm:$0xf]
        %v288 = vld [vmem:[%s223 + $0x3c] sm:$0xf]
        %s289 = sshra.s32 %s251, 3
        %s290 = sand.u32 %s251, 7
        %s291 = smul.addr %s289, 4
        %s292 = scalar_lea.vmem %s1, %s291
        %v293 = vld [vmem:[%s292] sm:$0xf]
        %v294 = vld [vmem:[%s292 + $0x4] sm:$0xf]
        %v295 = vld [vmem:[%s292 + $0x8] sm:$0xf]
        %v296 = vld [vmem:[%s292 + $0xc] sm:$0xf]
        %v297 = vld [vmem:[%s292 + $0x10] sm:$0xf]
        %v298 = vld [vmem:[%s292 + $0x14] sm:$0xf]
        %v299 = vld [vmem:[%s292 + $0x18] sm:$0xf]
        %v300 = vld [vmem:[%s292 + $0x1c] sm:$0xf]
        %v301 = vld [vmem:[%s292 + $0x20] sm:$0xf]
        %v302 = vld [vmem:[%s292 + $0x24] sm:$0xf]
        %v303 = vld [vmem:[%s292 + $0x28] sm:$0xf]
        %v304 = vld [vmem:[%s292 + $0x2c] sm:$0xf]
        %v305 = vld [vmem:[%s292 + $0x30] sm:$0xf]
        %v306 = vld [vmem:[%s292 + $0x34] sm:$0xf]
        %v307 = vld [vmem:[%s292 + $0x38] sm:$0xf]
        %v308 = vld [vmem:[%s292 + $0x3c] sm:$0xf]
        %v325 = vunpack.c.l.b16 %v273
        %v326 = vunpack.c.l.b16 %v274
        %v327 = vunpack.c.l.b16 %v275
        %v328 = vunpack.c.l.b16 %v276
        %v329 = vunpack.c.l.b16 %v277
        %v330 = vunpack.c.l.b16 %v278
        %v331 = vunpack.c.l.b16 %v279
        %v332 = vunpack.c.l.b16 %v280
        %v333 = vunpack.c.l.b16 %v281
        %v334 = vunpack.c.l.b16 %v282
        %v335 = vunpack.c.l.b16 %v283
        %v336 = vunpack.c.l.b16 %v284
        %v337 = vunpack.c.l.b16 %v285
        %v338 = vunpack.c.l.b16 %v286
        %v339 = vunpack.c.l.b16 %v287
        %v340 = vunpack.c.l.b16 %v288
        %v341 = vpack.c.b16 %v326, %v325
        %v342 = vpack.c.b16 %v328, %v327
        %v343 = vpack.c.b16 %v330, %v329
        %v344 = vpack.c.b16 %v332, %v331
        %v345 = vpack.c.b16 %v334, %v333
        %v346 = vpack.c.b16 %v336, %v335
        %v347 = vpack.c.b16 %v338, %v337
        %v348 = vpack.c.b16 %v340, %v339
        %v373 = vunpack.c.l.b16 %v293
        %v374 = vunpack.c.l.b16 %v294
        %v375 = vunpack.c.l.b16 %v295
        %v376 = vunpack.c.l.b16 %v296
        %v377 = vunpack.c.l.b16 %v297
        %v378 = vunpack.c.l.b16 %v298
        %v379 = vunpack.c.l.b16 %v299
        %v380 = vunpack.c.l.b16 %v300
        %v381 = vunpack.c.l.b16 %v301
        %v382 = vunpack.c.l.b16 %v302
        %v383 = vunpack.c.l.b16 %v303
        %v384 = vunpack.c.l.b16 %v304
        %v385 = vunpack.c.l.b16 %v305
        %v386 = vunpack.c.l.b16 %v306
        %v387 = vunpack.c.l.b16 %v307
        %v388 = vunpack.c.l.b16 %v308
        %v389 = vpack.c.b16 %v374, %v373
        %v390 = vpack.c.b16 %v376, %v375
        %v391 = vpack.c.b16 %v378, %v377
        %v392 = vpack.c.b16 %v380, %v379
        %v393 = vpack.c.b16 %v382, %v381
        %v394 = vpack.c.b16 %v384, %v383
        %v395 = vpack.c.b16 %v386, %v385
        %v396 = vpack.c.b16 %v388, %v387
        %405 = vmatpush.bf16.msra.mxu0 %v396
        %406 = vmatpush.bf16.msra.mxu0 %v395
        %407 = vmatpush.bf16.msra.mxu0 %v394
        %408 = vmatpush.bf16.msra.mxu0 %v393
        %409 = vmatpush.bf16.msra.mxu0 %v392
        %410 = vmatpush.bf16.msra.mxu0 %v391
        %411 = vmatpush.bf16.msra.mxu0 %v390
        %412 = vmatpush.bf16.msra.mxu0 %v389
        %413 = vmatmul.bf16.gmra.mxu0 %v341
        %v414 = vpop.f32.mrf.mxu0
        %v415 = vadd.f32 0.0, %v414
        %v416 = vpop.f32.mrf.mxu0
        %v417 = vadd.f32 0.0, %v416
        %418 = vmatmul.bf16.gmra.mxu0 %v342
        %v419 = vpop.f32.mrf.mxu0
        %v420 = vadd.f32 0.0, %v419
        %v421 = vpop.f32.mrf.mxu0
        %v422 = vadd.f32 0.0, %v421
        %423 = vmatmul.bf16.gmra.mxu0 %v343
        %v424 = vpop.f32.mrf.mxu0
        %v425 = vadd.f32 0.0, %v424
        %v426 = vpop.f32.mrf.mxu0
        %v427 = vadd.f32 0.0, %v426
        %428 = vmatmul.bf16.gmra.mxu0 %v344
        %v429 = vpop.f32.mrf.mxu0
        %v430 = vadd.f32 0.0, %v429
        %v431 = vpop.f32.mrf.mxu0
        %v432 = vadd.f32 0.0, %v431
        %433 = vmatmul.bf16.gmra.mxu0 %v345
        %v434 = vpop.f32.mrf.mxu0
        %v435 = vadd.f32 0.0, %v434
        %v436 = vpop.f32.mrf.mxu0
        %v437 = vadd.f32 0.0, %v436
        %438 = vmatmul.bf16.gmra.mxu0 %v346
        %v439 = vpop.f32.mrf.mxu0
        %v440 = vadd.f32 0.0, %v439
        %v441 = vpop.f32.mrf.mxu0
        %v442 = vadd.f32 0.0, %v441
        %443 = vmatmul.bf16.gmra.mxu0 %v347
        %v444 = vpop.f32.mrf.mxu0
        %v445 = vadd.f32 0.0, %v444
        %v446 = vpop.f32.mrf.mxu0
        %v447 = vadd.f32 0.0, %v446
        %448 = vmatmul.bf16.gmra.mxu0 %v348
        %v449 = vpop.f32.mrf.mxu0
        %v450 = vadd.f32 0.0, %v449
        %v451 = vpop.f32.mrf.mxu0
        %v452 = vadd.f32 0.0, %v451
        %453 = vdwg.mxu0
        %v454 = vadd.f32 %v257, %v415
        %v455 = vadd.f32 %v258, %v417
        %v456 = vadd.f32 %v259, %v420
        %v457 = vadd.f32 %v260, %v422
        %v458 = vadd.f32 %v261, %v425
        %v459 = vadd.f32 %v262, %v427
        %v460 = vadd.f32 %v263, %v430
        %v461 = vadd.f32 %v264, %v432
        %v462 = vadd.f32 %v265, %v435
        %v463 = vadd.f32 %v266, %v437
        %v464 = vadd.f32 %v267, %v440
        %v465 = vadd.f32 %v268, %v442
        %v466 = vadd.f32 %v269, %v445
        %v467 = vadd.f32 %v270, %v447
        %v468 = vadd.f32 %v271, %v450
        %v469 = vadd.f32 %v272, %v452
        %470 = vst [vmem:[#allocation4] sm:$0xff] %v454
        %471 = vst [vmem:[#allocation4 + $0x8] sm:$0xff] %v455
        %472 = vst [vmem:[#allocation4 + $0x10] sm:$0xff] %v456
        %473 = vst [vmem:[#allocation4 + $0x18] sm:$0xff] %v457
        %474 = vst [vmem:[#allocation4 + $0x20] sm:$0xff] %v458
        %475 = vst [vmem:[#allocation4 + $0x28] sm:$0xff] %v459
        %476 = vst [vmem:[#allocation4 + $0x30] sm:$0xff] %v460
        %477 = vst [vmem:[#allocation4 + $0x38] sm:$0xff] %v461
        %478 = vst [vmem:[#allocation4 + $0x40] sm:$0xff] %v462
        %479 = vst [vmem:[#allocation4 + $0x48] sm:$0xff] %v463
        %480 = vst [vmem:[#allocation4 + $0x50] sm:$0xff] %v464
        %481 = vst [vmem:[#allocation4 + $0x58] sm:$0xff] %v465
        %482 = vst [vmem:[#allocation4 + $0x60] sm:$0xff] %v466
        %483 = vst [vmem:[#allocation4 + $0x68] sm:$0xff] %v467
        %484 = vst [vmem:[#allocation4 + $0x70] sm:$0xff] %v468
        %485 = vst [vmem:[#allocation4 + $0x78] sm:$0xff] %v469
        // Predicated region
        $region45: #{graph_sage_forward.1} parent=43 // pred_check
          %p486 = pneg %p231
        $region46: #{graph_sage_forward.1} parent=43 // pred_check_branch
          %488 = sbr.rel (%p486) target = $region48
        $region47: #{graph_sage_forward.1} parent=43 // pred_region
          %s489 = sshra.s32 %s252, 3
          %s490 = sand.u32 %s252, 7
          %s491 = smul.addr %s489, 4
          %s492 = scalar_lea.vmem %s1, %s491
          %v493 = vld [vmem:[%s492] sm:$0xf]
          %v494 = vld [vmem:[%s492 + $0x4] sm:$0xf]
          %v495 = vld [vmem:[%s492 + $0x8] sm:$0xf]
          %v496 = vld [vmem:[%s492 + $0xc] sm:$0xf]
          %v497 = vld [vmem:[%s492 + $0x10] sm:$0xf]
          %v498 = vld [vmem:[%s492 + $0x14] sm:$0xf]
          %v499 = vld [vmem:[%s492 + $0x18] sm:$0xf]
          %v500 = vld [vmem:[%s492 + $0x1c] sm:$0xf]
          %v501 = vld [vmem:[%s492 + $0x20] sm:$0xf]
          %v502 = vld [vmem:[%s492 + $0x24] sm:$0xf]
          %v503 = vld [vmem:[%s492 + $0x28] sm:$0xf]
          %v504 = vld [vmem:[%s492 + $0x2c] sm:$0xf]
          %v505 = vld [vmem:[%s492 + $0x30] sm:$0xf]
          %v506 = vld [vmem:[%s492 + $0x34] sm:$0xf]
          %v507 = vld [vmem:[%s492 + $0x38] sm:$0xf]
          %v508 = vld [vmem:[%s492 + $0x3c] sm:$0xf]
          %v509 = vld [vmem:[#allocation4] sm:$0xff]
          %v510 = vld [vmem:[#allocation4 + $0x8] sm:$0xff]
          %v511 = vld [vmem:[#allocation4 + $0x10] sm:$0xff]
          %v512 = vld [vmem:[#allocation4 + $0x18] sm:$0xff]
          %v513 = vld [vmem:[#allocation4 + $0x20] sm:$0xff]
          %v514 = vld [vmem:[#allocation4 + $0x28] sm:$0xff]
          %v515 = vld [vmem:[#allocation4 + $0x30] sm:$0xff]
          %v516 = vld [vmem:[#allocation4 + $0x38] sm:$0xff]
          %v517 = vld [vmem:[#allocation4 + $0x40] sm:$0xff]
          %v518 = vld [vmem:[#allocation4 + $0x48] sm:$0xff]
          %v519 = vld [vmem:[#allocation4 + $0x50] sm:$0xff]
          %v520 = vld [vmem:[#allocation4 + $0x58] sm:$0xff]
          %v521 = vld [vmem:[#allocation4 + $0x60] sm:$0xff]
          %v522 = vld [vmem:[#allocation4 + $0x68] sm:$0xff]
          %v523 = vld [vmem:[#allocation4 + $0x70] sm:$0xff]
          %v524 = vld [vmem:[#allocation4 + $0x78] sm:$0xff]
          %v525 = vpack.c.bf16 %v510, %v509
          %v526 = vpack.c.bf16 %v512, %v511
          %v527 = vpack.c.bf16 %v514, %v513
          %v528 = vpack.c.bf16 %v516, %v515
          %v529 = vpack.c.bf16 %v518, %v517
          %v530 = vpack.c.bf16 %v520, %v519
          %v531 = vpack.c.bf16 %v522, %v521
          %v532 = vpack.c.bf16 %v524, %v523
          %s533 = smul.u32 %s20, 2
          %s534 = smul.u32 %s533, 16
          %s535 = smul.addr %s534, 4
          %s536 = scalar_lea.vmem %s2, %s535
          %v537 = vld [vmem:[%s536] sm:$0xf]
          %v538 = vld [vmem:[%s536 + $0x4] sm:$0xf]
          %v539 = vld [vmem:[%s536 + $0x8] sm:$0xf]
          %v540 = vld [vmem:[%s536 + $0xc] sm:$0xf]
          %v541 = vld [vmem:[%s536 + $0x10] sm:$0xf]
          %v542 = vld [vmem:[%s536 + $0x14] sm:$0xf]
          %v543 = vld [vmem:[%s536 + $0x18] sm:$0xf]
          %v544 = vld [vmem:[%s536 + $0x1c] sm:$0xf]
          %v545 = vld [vmem:[%s536 + $0x20] sm:$0xf]
          %v546 = vld [vmem:[%s536 + $0x24] sm:$0xf]
          %v547 = vld [vmem:[%s536 + $0x28] sm:$0xf]
          %v548 = vld [vmem:[%s536 + $0x2c] sm:$0xf]
          %v549 = vld [vmem:[%s536 + $0x30] sm:$0xf]
          %v550 = vld [vmem:[%s536 + $0x34] sm:$0xf]
          %v551 = vld [vmem:[%s536 + $0x38] sm:$0xf]
          %v552 = vld [vmem:[%s536 + $0x3c] sm:$0xf]
          %s553 = sadd.s32 %s533, 1
          %s554 = smul.u32 %s553, 16
          %s555 = smul.addr %s554, 4
          %s556 = scalar_lea.vmem %s2, %s555
          %v557 = vld [vmem:[%s556] sm:$0xf]
          %v558 = vld [vmem:[%s556 + $0x4] sm:$0xf]
          %v559 = vld [vmem:[%s556 + $0x8] sm:$0xf]
          %v560 = vld [vmem:[%s556 + $0xc] sm:$0xf]
          %v561 = vld [vmem:[%s556 + $0x10] sm:$0xf]
          %v562 = vld [vmem:[%s556 + $0x14] sm:$0xf]
          %v563 = vld [vmem:[%s556 + $0x18] sm:$0xf]
          %v564 = vld [vmem:[%s556 + $0x1c] sm:$0xf]
          %v565 = vld [vmem:[%s556 + $0x20] sm:$0xf]
          %v566 = vld [vmem:[%s556 + $0x24] sm:$0xf]
          %v567 = vld [vmem:[%s556 + $0x28] sm:$0xf]
          %v568 = vld [vmem:[%s556 + $0x2c] sm:$0xf]
          %v569 = vld [vmem:[%s556 + $0x30] sm:$0xf]
          %v570 = vld [vmem:[%s556 + $0x34] sm:$0xf]
          %v571 = vld [vmem:[%s556 + $0x38] sm:$0xf]
          %v572 = vld [vmem:[%s556 + $0x3c] sm:$0xf]
          %v589 = vunpack.c.l.b16 %v493
          %v590 = vunpack.c.l.b16 %v494
          %v591 = vunpack.c.l.b16 %v495
          %v592 = vunpack.c.l.b16 %v496
          %v593 = vunpack.c.l.b16 %v497
          %v594 = vunpack.c.l.b16 %v498
          %v595 = vunpack.c.l.b16 %v499
          %v596 = vunpack.c.l.b16 %v500
          %v597 = vunpack.c.l.b16 %v501
          %v598 = vunpack.c.l.b16 %v502
          %v599 = vunpack.c.l.b16 %v503
          %v600 = vunpack.c.l.b16 %v504
          %v601 = vunpack.c.l.b16 %v505
          %v602 = vunpack.c.l.b16 %v506
          %v603 = vunpack.c.l.b16 %v507
          %v604 = vunpack.c.l.b16 %v508
          %v605 = vpack.c.b16 %v590, %v589
          %v606 = vpack.c.b16 %v592, %v591
          %v607 = vpack.c.b16 %v594, %v593
          %v608 = vpack.c.b16 %v596, %v595
          %v609 = vpack.c.b16 %v598, %v597
          %v610 = vpack.c.b16 %v600, %v599
          %v611 = vpack.c.b16 %v602, %v601
          %v612 = vpack.c.b16 %v604, %v603
          %v637 = vunpack.c.l.b16 %v557
          %v638 = vunpack.c.l.b16 %v558
          %v639 = vunpack.c.l.b16 %v559
          %v640 = vunpack.c.l.b16 %v560
          %v641 = vunpack.c.l.b16 %v561
          %v642 = vunpack.c.l.b16 %v562
          %v643 = vunpack.c.l.b16 %v563
          %v644 = vunpack.c.l.b16 %v564
          %v645 = vunpack.c.l.b16 %v565
          %v646 = vunpack.c.l.b16 %v566
          %v647 = vunpack.c.l.b16 %v567
          %v648 = vunpack.c.l.b16 %v568
          %v649 = vunpack.c.l.b16 %v569
          %v650 = vunpack.c.l.b16 %v570
          %v651 = vunpack.c.l.b16 %v571
          %v652 = vunpack.c.l.b16 %v572
          %v653 = vpack.c.b16 %v638, %v637
          %v654 = vpack.c.b16 %v640, %v639
          %v655 = vpack.c.b16 %v642, %v641
          %v656 = vpack.c.b16 %v644, %v643
          %v657 = vpack.c.b16 %v646, %v645
          %v658 = vpack.c.b16 %v648, %v647
          %v659 = vpack.c.b16 %v650, %v649
          %v660 = vpack.c.b16 %v652, %v651
          %669 = vmatpush.bf16.msra.mxu0 %v660
          %670 = vmatpush.bf16.msra.mxu0 %v659
          %671 = vmatpush.bf16.msra.mxu0 %v658
          %672 = vmatpush.bf16.msra.mxu0 %v657
          %673 = vmatpush.bf16.msra.mxu0 %v656
          %674 = vmatpush.bf16.msra.mxu0 %v655
          %675 = vmatpush.bf16.msra.mxu0 %v654
          %676 = vmatpush.bf16.msra.mxu0 %v653
          %677 = vmatmul.bf16.gmra.mxu0 %v605
          %v678 = vpop.f32.mrf.mxu0
          %v679 = vadd.f32 0.0, %v678
          %v680 = vpop.f32.mrf.mxu0
          %v681 = vadd.f32 0.0, %v680
          %682 = vmatmul.bf16.gmra.mxu0 %v606
          %v683 = vpop.f32.mrf.mxu0
          %v684 = vadd.f32 0.0, %v683
          %v685 = vpop.f32.mrf.mxu0
          %v686 = vadd.f32 0.0, %v685
          %687 = vmatmul.bf16.gmra.mxu0 %v607
          %v688 = vpop.f32.mrf.mxu0
          %v689 = vadd.f32 0.0, %v688
          %v690 = vpop.f32.mrf.mxu0
          %v691 = vadd.f32 0.0, %v690
          %692 = vmatmul.bf16.gmra.mxu0 %v608
          %v693 = vpop.f32.mrf.mxu0
          %v694 = vadd.f32 0.0, %v693
          %v695 = vpop.f32.mrf.mxu0
          %v696 = vadd.f32 0.0, %v695
          %697 = vmatmul.bf16.gmra.mxu0 %v609
          %v698 = vpop.f32.mrf.mxu0
          %v699 = vadd.f32 0.0, %v698
          %v700 = vpop.f32.mrf.mxu0
          %v701 = vadd.f32 0.0, %v700
          %702 = vmatmul.bf16.gmra.mxu0 %v610
          %v703 = vpop.f32.mrf.mxu0
          %v704 = vadd.f32 0.0, %v703
          %v705 = vpop.f32.mrf.mxu0
          %v706 = vadd.f32 0.0, %v705
          %707 = vmatmul.bf16.gmra.mxu0 %v611
          %v708 = vpop.f32.mrf.mxu0
          %v709 = vadd.f32 0.0, %v708
          %v710 = vpop.f32.mrf.mxu0
          %v711 = vadd.f32 0.0, %v710
          %712 = vmatmul.bf16.gmra.mxu0 %v612
          %v713 = vpop.f32.mrf.mxu0
          %v714 = vadd.f32 0.0, %v713
          %v715 = vpop.f32.mrf.mxu0
          %v716 = vadd.f32 0.0, %v715
          %717 = vdwg.mxu0
          %v734 = vunpack.c.l.b16 %v537
          %v735 = vunpack.c.l.b16 %v538
          %v736 = vunpack.c.l.b16 %v539
          %v737 = vunpack.c.l.b16 %v540
          %v738 = vunpack.c.l.b16 %v541
          %v739 = vunpack.c.l.b16 %v542
          %v740 = vunpack.c.l.b16 %v543
          %v741 = vunpack.c.l.b16 %v544
          %v742 = vunpack.c.l.b16 %v545
          %v743 = vunpack.c.l.b16 %v546
          %v744 = vunpack.c.l.b16 %v547
          %v745 = vunpack.c.l.b16 %v548
          %v746 = vunpack.c.l.b16 %v549
          %v747 = vunpack.c.l.b16 %v550
          %v748 = vunpack.c.l.b16 %v551
          %v749 = vunpack.c.l.b16 %v552
          %v750 = vpack.c.b16 %v735, %v734
          %v751 = vpack.c.b16 %v737, %v736
          %v752 = vpack.c.b16 %v739, %v738
          %v753 = vpack.c.b16 %v741, %v740
          %v754 = vpack.c.b16 %v743, %v742
          %v755 = vpack.c.b16 %v745, %v744
          %v756 = vpack.c.b16 %v747, %v746
          %v757 = vpack.c.b16 %v749, %v748
          %766 = vmatpush.bf16.msra.mxu0 %v757
          %767 = vmatpush.bf16.msra.mxu0 %v756
          %768 = vmatpush.bf16.msra.mxu0 %v755
          %769 = vmatpush.bf16.msra.mxu0 %v754
          %770 = vmatpush.bf16.msra.mxu0 %v753
          %771 = vmatpush.bf16.msra.mxu0 %v752
          %772 = vmatpush.bf16.msra.mxu0 %v751
          %773 = vmatpush.bf16.msra.mxu0 %v750
          %774 = vmatmul.bf16.gmra.mxu0 %v525
          %v775 = vpop.f32.mrf.mxu0
          %v776 = vadd.f32 %v679, %v775
          %v777 = vpop.f32.mrf.mxu0
          %v778 = vadd.f32 %v681, %v777
          %779 = vmatmul.bf16.gmra.mxu0 %v526
          %v780 = vpop.f32.mrf.mxu0
          %v781 = vadd.f32 %v684, %v780
          %v782 = vpop.f32.mrf.mxu0
          %v783 = vadd.f32 %v686, %v782
          %784 = vmatmul.bf16.gmra.mxu0 %v527
          %v785 = vpop.f32.mrf.mxu0
          %v786 = vadd.f32 %v689, %v785
          %v787 = vpop.f32.mrf.mxu0
          %v788 = vadd.f32 %v691, %v787
          %789 = vmatmul.bf16.gmra.mxu0 %v528
          %v790 = vpop.f32.mrf.mxu0
          %v791 = vadd.f32 %v694, %v790
          %v792 = vpop.f32.mrf.mxu0
          %v793 = vadd.f32 %v696, %v792
          %794 = vmatmul.bf16.gmra.mxu0 %v529
          %v795 = vpop.f32.mrf.mxu0
          %v796 = vadd.f32 %v699, %v795
          %v797 = vpop.f32.mrf.mxu0
          %v798 = vadd.f32 %v701, %v797
          %799 = vmatmul.bf16.gmra.mxu0 %v530
          %v800 = vpop.f32.mrf.mxu0
          %v801 = vadd.f32 %v704, %v800
          %v802 = vpop.f32.mrf.mxu0
          %v803 = vadd.f32 %v706, %v802
          %804 = vmatmul.bf16.gmra.mxu0 %v531
          %v805 = vpop.f32.mrf.mxu0
          %v806 = vadd.f32 %v709, %v805
          %v807 = vpop.f32.mrf.mxu0
          %v808 = vadd.f32 %v711, %v807
          %809 = vmatmul.bf16.gmra.mxu0 %v532
          %v810 = vpop.f32.mrf.mxu0
          %v811 = vadd.f32 %v714, %v810
          %v812 = vpop.f32.mrf.mxu0
          %v813 = vadd.f32 %v716, %v812
          %814 = vdwg.mxu0
          %s815 = scalar_lea.vmem %s3, %s20
          %v816 = vld [vmem:[%s815] sm:$0x1]
          %v818 = vperm.slane %v816, 0
          %v820 = vadd.f32 %v776, %v818
          %v821 = vadd.f32 %v778, %v818
          %v822 = vadd.f32 %v781, %v818
          %v823 = vadd.f32 %v783, %v818
          %v824 = vadd.f32 %v786, %v818
          %v825 = vadd.f32 %v788, %v818
          %v826 = vadd.f32 %v791, %v818
          %v827 = vadd.f32 %v793, %v818
          %v828 = vadd.f32 %v796, %v818
          %v829 = vadd.f32 %v798, %v818
          %v830 = vadd.f32 %v801, %v818
          %v831 = vadd.f32 %v803, %v818
          %v832 = vadd.f32 %v806, %v818
          %v833 = vadd.f32 %v808, %v818
          %v834 = vadd.f32 %v811, %v818
          %v835 = vadd.f32 %v813, %v818
          %p836 = scmp.lt.s32.totalorder %s20, 2
          // Predicated region
          $region49: #{graph_sage_forward.1} parent=47 // pred_check
            %p837 = pneg %p836
          $region50: #{graph_sage_forward.1} parent=47 // pred_check_branch
            %839 = sbr.rel (%p837) target = $region52
          $region51: #{graph_sage_forward.1} parent=47 // pred_region
            %v840 = vmax.f32 %v820, 0.0
            %v841 = vmax.f32 %v821, 0.0
            %v842 = vmax.f32 %v822, 0.0
            %v843 = vmax.f32 %v823, 0.0
            %v844 = vmax.f32 %v824, 0.0
            %v845 = vmax.f32 %v825, 0.0
            %v846 = vmax.f32 %v826, 0.0
            %v847 = vmax.f32 %v827, 0.0
            %v848 = vmax.f32 %v828, 0.0
            %v849 = vmax.f32 %v829, 0.0
            %v850 = vmax.f32 %v830, 0.0
            %v851 = vmax.f32 %v831, 0.0
            %v852 = vmax.f32 %v832, 0.0
            %v853 = vmax.f32 %v833, 0.0
            %v854 = vmax.f32 %v834, 0.0
            %v855 = vmax.f32 %v835, 0.0
            %v856 = vpack.c.bf16 %v840, %v840
            %v857 = vpack.c.bf16 %v841, %v841
            %v858 = vpack.c.bf16 %v842, %v842
            %v859 = vpack.c.bf16 %v843, %v843
            %v860 = vpack.c.bf16 %v844, %v844
            %v861 = vpack.c.bf16 %v845, %v845
            %v862 = vpack.c.bf16 %v846, %v846
            %v863 = vpack.c.bf16 %v847, %v847
            %v864 = vpack.c.bf16 %v848, %v848
            %v865 = vpack.c.bf16 %v849, %v849
            %v866 = vpack.c.bf16 %v850, %v850
            %v867 = vpack.c.bf16 %v851, %v851
            %v868 = vpack.c.bf16 %v852, %v852
            %v869 = vpack.c.bf16 %v853, %v853
            %v870 = vpack.c.bf16 %v854, %v854
            %v871 = vpack.c.bf16 %v855, %v855
            %s872 = smul.addr %s489, 4
            %s873 = scalar_lea.vmem [#allocation2], %s872
            %874 = vst [vmem:[%s873] sm:$0xf] %v856
            %875 = vst [vmem:[%s873 + $0x4] sm:$0xf] %v857
            %876 = vst [vmem:[%s873 + $0x8] sm:$0xf] %v858
            %877 = vst [vmem:[%s873 + $0xc] sm:$0xf] %v859
            %878 = vst [vmem:[%s873 + $0x10] sm:$0xf] %v860
            %879 = vst [vmem:[%s873 + $0x14] sm:$0xf] %v861
            %880 = vst [vmem:[%s873 + $0x18] sm:$0xf] %v862
            %881 = vst [vmem:[%s873 + $0x1c] sm:$0xf] %v863
            %882 = vst [vmem:[%s873 + $0x20] sm:$0xf] %v864
            %883 = vst [vmem:[%s873 + $0x24] sm:$0xf] %v865
            %884 = vst [vmem:[%s873 + $0x28] sm:$0xf] %v866
            %885 = vst [vmem:[%s873 + $0x2c] sm:$0xf] %v867
            %886 = vst [vmem:[%s873 + $0x30] sm:$0xf] %v868
            %887 = vst [vmem:[%s873 + $0x34] sm:$0xf] %v869
            %888 = vst [vmem:[%s873 + $0x38] sm:$0xf] %v870
            %889 = vst [vmem:[%s873 + $0x3c] sm:$0xf] %v871
          $region52: #{graph_sage_forward.1} parent=47 // pred_fallthru
            _
          %p890 = scmp.eq.s32.totalorder %s20, 2
          // Predicated region
          $region53: #{graph_sage_forward.1} parent=47 // pred_check
            %p891 = pneg %p890
          $region54: #{graph_sage_forward.1} parent=47 // pred_check_branch
            %893 = sbr.rel (%p891) target = $region56
          $region55: #{graph_sage_forward.1} parent=47 // pred_region
            %894 = vst [vmem:[%s229] sm:$0xff] %v820
            %895 = vst [vmem:[%s229 + $0x8] sm:$0xff] %v821
            %896 = vst [vmem:[%s229 + $0x10] sm:$0xff] %v822
            %897 = vst [vmem:[%s229 + $0x18] sm:$0xff] %v823
            %898 = vst [vmem:[%s229 + $0x20] sm:$0xff] %v824
            %899 = vst [vmem:[%s229 + $0x28] sm:$0xff] %v825
            %900 = vst [vmem:[%s229 + $0x30] sm:$0xff] %v826
            %901 = vst [vmem:[%s229 + $0x38] sm:$0xff] %v827
            %902 = vst [vmem:[%s229 + $0x40] sm:$0xff] %v828
            %903 = vst [vmem:[%s229 + $0x48] sm:$0xff] %v829
            %904 = vst [vmem:[%s229 + $0x50] sm:$0xff] %v830
            %905 = vst [vmem:[%s229 + $0x58] sm:$0xff] %v831
            %906 = vst [vmem:[%s229 + $0x60] sm:$0xff] %v832
            %907 = vst [vmem:[%s229 + $0x68] sm:$0xff] %v833
            %908 = vst [vmem:[%s229 + $0x70] sm:$0xff] %v834
            %909 = vst [vmem:[%s229 + $0x78] sm:$0xff] %v835
          $region56: #{graph_sage_forward.1} parent=47 // pred_fallthru
            _
        $region48: #{graph_sage_forward.1} parent=43 // pred_fallthru
          _
      $region44: #{graph_sage_forward.1} parent=35 // pred_fallthru
        _
      %p910 = scmp.lt.s32.totalorder %s20, 0
      %s911 = ssub.s32 0, %s20
      %s912 = scalar_select %p910, %s911, %s20
      %s913 = sand.u32 %s912, 1
      %s914 = ssub.s32 0, %s913
      %s915 = scalar_select %p910, %s914, %s913
      %p916 = scmp.ne.s32.totalorder %s915, 0
      %p917 = scmp.lt.s32.totalorder %s915, 0
      %p918 = pnand %p917, %p916
      %p919 = pneg %p918
      %s920 = sadd.s32 %s915, 2
      %s921 = scalar_select %p919, %s920, %s915
      %p922 = scmp.eq.s32.totalorder %s921, 1
      // Predicated region
      $region57: #{graph_sage_forward.1} parent=35 // pred_check
        %p923 = pneg %p922
      $region58: #{graph_sage_forward.1} parent=35 // pred_check_branch
        %925 = sbr.rel (%p923) target = $region60
      $region59: #{graph_sage_forward.1} parent=35 // pred_region
        %v926 = vld [vmem:[#allocation4] sm:$0xff]
        %v927 = vld [vmem:[#allocation4 + $0x8] sm:$0xff]
        %v928 = vld [vmem:[#allocation4 + $0x10] sm:$0xff]
        %v929 = vld [vmem:[#allocation4 + $0x18] sm:$0xff]
        %v930 = vld [vmem:[#allocation4 + $0x20] sm:$0xff]
        %v931 = vld [vmem:[#allocation4 + $0x28] sm:$0xff]
        %v932 = vld [vmem:[#allocation4 + $0x30] sm:$0xff]
        %v933 = vld [vmem:[#allocation4 + $0x38] sm:$0xff]
        %v934 = vld [vmem:[#allocation4 + $0x40] sm:$0xff]
        %v935 = vld [vmem:[#allocation4 + $0x48] sm:$0xff]
        %v936 = vld [vmem:[#allocation4 + $0x50] sm:$0xff]
        %v937 = vld [vmem:[#allocation4 + $0x58] sm:$0xff]
        %v938 = vld [vmem:[#allocation4 + $0x60] sm:$0xff]
        %v939 = vld [vmem:[#allocation4 + $0x68] sm:$0xff]
        %v940 = vld [vmem:[#allocation4 + $0x70] sm:$0xff]
        %v941 = vld [vmem:[#allocation4 + $0x78] sm:$0xff]
        %v942 = vld [vmem:[%s223] sm:$0xf]
        %v943 = vld [vmem:[%s223 + $0x4] sm:$0xf]
        %v944 = vld [vmem:[%s223 + $0x8] sm:$0xf]
        %v945 = vld [vmem:[%s223 + $0xc] sm:$0xf]
        %v946 = vld [vmem:[%s223 + $0x10] sm:$0xf]
        %v947 = vld [vmem:[%s223 + $0x14] sm:$0xf]
        %v948 = vld [vmem:[%s223 + $0x18] sm:$0xf]
        %v949 = vld [vmem:[%s223 + $0x1c] sm:$0xf]
        %v950 = vld [vmem:[%s223 + $0x20] sm:$0xf]
        %v951 = vld [vmem:[%s223 + $0x24] sm:$0xf]
        %v952 = vld [vmem:[%s223 + $0x28] sm:$0xf]
        %v953 = vld [vmem:[%s223 + $0x2c] sm:$0xf]
        %v954 = vld [vmem:[%s223 + $0x30] sm:$0xf]
        %v955 = vld [vmem:[%s223 + $0x34] sm:$0xf]
        %v956 = vld [vmem:[%s223 + $0x38] sm:$0xf]
        %v957 = vld [vmem:[%s223 + $0x3c] sm:$0xf]
        %s958 = sshra.s32 %s251, 3
        %s959 = sand.u32 %s251, 7
        %s960 = smul.addr %s958, 4
        %s961 = scalar_lea.vmem [#allocation2], %s960
        %v962 = vld [vmem:[%s961] sm:$0xf]
        %v963 = vld [vmem:[%s961 + $0x4] sm:$0xf]
        %v964 = vld [vmem:[%s961 + $0x8] sm:$0xf]
        %v965 = vld [vmem:[%s961 + $0xc] sm:$0xf]
        %v966 = vld [vmem:[%s961 + $0x10] sm:$0xf]
        %v967 = vld [vmem:[%s961 + $0x14] sm:$0xf]
        %v968 = vld [vmem:[%s961 + $0x18] sm:$0xf]
        %v969 = vld [vmem:[%s961 + $0x1c] sm:$0xf]
        %v970 = vld [vmem:[%s961 + $0x20] sm:$0xf]
        %v971 = vld [vmem:[%s961 + $0x24] sm:$0xf]
        %v972 = vld [vmem:[%s961 + $0x28] sm:$0xf]
        %v973 = vld [vmem:[%s961 + $0x2c] sm:$0xf]
        %v974 = vld [vmem:[%s961 + $0x30] sm:$0xf]
        %v975 = vld [vmem:[%s961 + $0x34] sm:$0xf]
        %v976 = vld [vmem:[%s961 + $0x38] sm:$0xf]
        %v977 = vld [vmem:[%s961 + $0x3c] sm:$0xf]
        %v994 = vunpack.c.l.b16 %v942
        %v995 = vunpack.c.l.b16 %v943
        %v996 = vunpack.c.l.b16 %v944
        %v997 = vunpack.c.l.b16 %v945
        %v998 = vunpack.c.l.b16 %v946
        %v999 = vunpack.c.l.b16 %v947
        %v1000 = vunpack.c.l.b16 %v948
        %v1001 = vunpack.c.l.b16 %v949
        %v1002 = vunpack.c.l.b16 %v950
        %v1003 = vunpack.c.l.b16 %v951
        %v1004 = vunpack.c.l.b16 %v952
        %v1005 = vunpack.c.l.b16 %v953
        %v1006 = vunpack.c.l.b16 %v954
        %v1007 = vunpack.c.l.b16 %v955
        %v1008 = vunpack.c.l.b16 %v956
        %v1009 = vunpack.c.l.b16 %v957
        %v1010 = vpack.c.b16 %v995, %v994
        %v1011 = vpack.c.b16 %v997, %v996
        %v1012 = vpack.c.b16 %v999, %v998
        %v1013 = vpack.c.b16 %v1001, %v1000
        %v1014 = vpack.c.b16 %v1003, %v1002
        %v1015 = vpack.c.b16 %v1005, %v1004
        %v1016 = vpack.c.b16 %v1007, %v1006
        %v1017 = vpack.c.b16 %v1009, %v1008
        %v1042 = vunpack.c.l.b16 %v962
        %v1043 = vunpack.c.l.b16 %v963
        %v1044 = vunpack.c.l.b16 %v964
        %v1045 = vunpack.c.l.b16 %v965
        %v1046 = vunpack.c.l.b16 %v966
        %v1047 = vunpack.c.l.b16 %v967
        %v1048 = vunpack.c.l.b16 %v968
        %v1049 = vunpack.c.l.b16 %v969
        %v1050 = vunpack.c.l.b16 %v970
        %v1051 = vunpack.c.l.b16 %v971
        %v1052 = vunpack.c.l.b16 %v972
        %v1053 = vunpack.c.l.b16 %v973
        %v1054 = vunpack.c.l.b16 %v974
        %v1055 = vunpack.c.l.b16 %v975
        %v1056 = vunpack.c.l.b16 %v976
        %v1057 = vunpack.c.l.b16 %v977
        %v1058 = vpack.c.b16 %v1043, %v1042
        %v1059 = vpack.c.b16 %v1045, %v1044
        %v1060 = vpack.c.b16 %v1047, %v1046
        %v1061 = vpack.c.b16 %v1049, %v1048
        %v1062 = vpack.c.b16 %v1051, %v1050
        %v1063 = vpack.c.b16 %v1053, %v1052
        %v1064 = vpack.c.b16 %v1055, %v1054
        %v1065 = vpack.c.b16 %v1057, %v1056
        %1074 = vmatpush.bf16.msra.mxu0 %v1065
        %1075 = vmatpush.bf16.msra.mxu0 %v1064
        %1076 = vmatpush.bf16.msra.mxu0 %v1063
        %1077 = vmatpush.bf16.msra.mxu0 %v1062
        %1078 = vmatpush.bf16.msra.mxu0 %v1061
        %1079 = vmatpush.bf16.msra.mxu0 %v1060
        %1080 = vmatpush.bf16.msra.mxu0 %v1059
        %1081 = vmatpush.bf16.msra.mxu0 %v1058
        %1082 = vmatmul.bf16.gmra.mxu0 %v1010
        %v1083 = vpop.f32.mrf.mxu0
        %v1084 = vadd.f32 0.0, %v1083
        %v1085 = vpop.f32.mrf.mxu0
        %v1086 = vadd.f32 0.0, %v1085
        %1087 = vmatmul.bf16.gmra.mxu0 %v1011
        %v1088 = vpop.f32.mrf.mxu0
        %v1089 = vadd.f32 0.0, %v1088
        %v1090 = vpop.f32.mrf.mxu0
        %v1091 = vadd.f32 0.0, %v1090
        %1092 = vmatmul.bf16.gmra.mxu0 %v1012
        %v1093 = vpop.f32.mrf.mxu0
        %v1094 = vadd.f32 0.0, %v1093
        %v1095 = vpop.f32.mrf.mxu0
        %v1096 = vadd.f32 0.0, %v1095
        %1097 = vmatmul.bf16.gmra.mxu0 %v1013
        %v1098 = vpop.f32.mrf.mxu0
        %v1099 = vadd.f32 0.0, %v1098
        %v1100 = vpop.f32.mrf.mxu0
        %v1101 = vadd.f32 0.0, %v1100
        %1102 = vmatmul.bf16.gmra.mxu0 %v1014
        %v1103 = vpop.f32.mrf.mxu0
        %v1104 = vadd.f32 0.0, %v1103
        %v1105 = vpop.f32.mrf.mxu0
        %v1106 = vadd.f32 0.0, %v1105
        %1107 = vmatmul.bf16.gmra.mxu0 %v1015
        %v1108 = vpop.f32.mrf.mxu0
        %v1109 = vadd.f32 0.0, %v1108
        %v1110 = vpop.f32.mrf.mxu0
        %v1111 = vadd.f32 0.0, %v1110
        %1112 = vmatmul.bf16.gmra.mxu0 %v1016
        %v1113 = vpop.f32.mrf.mxu0
        %v1114 = vadd.f32 0.0, %v1113
        %v1115 = vpop.f32.mrf.mxu0
        %v1116 = vadd.f32 0.0, %v1115
        %1117 = vmatmul.bf16.gmra.mxu0 %v1017
        %v1118 = vpop.f32.mrf.mxu0
        %v1119 = vadd.f32 0.0, %v1118
        %v1120 = vpop.f32.mrf.mxu0
        %v1121 = vadd.f32 0.0, %v1120
        %1122 = vdwg.mxu0
        %v1123 = vadd.f32 %v926, %v1084
        %v1124 = vadd.f32 %v927, %v1086
        %v1125 = vadd.f32 %v928, %v1089
        %v1126 = vadd.f32 %v929, %v1091
        %v1127 = vadd.f32 %v930, %v1094
        %v1128 = vadd.f32 %v931, %v1096
        %v1129 = vadd.f32 %v932, %v1099
        %v1130 = vadd.f32 %v933, %v1101
        %v1131 = vadd.f32 %v934, %v1104
        %v1132 = vadd.f32 %v935, %v1106
        %v1133 = vadd.f32 %v936, %v1109
        %v1134 = vadd.f32 %v937, %v1111
        %v1135 = vadd.f32 %v938, %v1114
        %v1136 = vadd.f32 %v939, %v1116
        %v1137 = vadd.f32 %v940, %v1119
        %v1138 = vadd.f32 %v941, %v1121
        %1139 = vst [vmem:[#allocation4] sm:$0xff] %v1123
        %1140 = vst [vmem:[#allocation4 + $0x8] sm:$0xff] %v1124
        %1141 = vst [vmem:[#allocation4 + $0x10] sm:$0xff] %v1125
        %1142 = vst [vmem:[#allocation4 + $0x18] sm:$0xff] %v1126
        %1143 = vst [vmem:[#allocation4 + $0x20] sm:$0xff] %v1127
        %1144 = vst [vmem:[#allocation4 + $0x28] sm:$0xff] %v1128
        %1145 = vst [vmem:[#allocation4 + $0x30] sm:$0xff] %v1129
        %1146 = vst [vmem:[#allocation4 + $0x38] sm:$0xff] %v1130
        %1147 = vst [vmem:[#allocation4 + $0x40] sm:$0xff] %v1131
        %1148 = vst [vmem:[#allocation4 + $0x48] sm:$0xff] %v1132
        %1149 = vst [vmem:[#allocation4 + $0x50] sm:$0xff] %v1133
        %1150 = vst [vmem:[#allocation4 + $0x58] sm:$0xff] %v1134
        %1151 = vst [vmem:[#allocation4 + $0x60] sm:$0xff] %v1135
        %1152 = vst [vmem:[#allocation4 + $0x68] sm:$0xff] %v1136
        %1153 = vst [vmem:[#allocation4 + $0x70] sm:$0xff] %v1137
        %1154 = vst [vmem:[#allocation4 + $0x78] sm:$0xff] %v1138
        // Predicated region
        $region61: #{graph_sage_forward.1} parent=59 // pred_check
          %p1155 = pneg %p231
        $region62: #{graph_sage_forward.1} parent=59 // pred_check_branch
          %1157 = sbr.rel (%p1155) target = $region64
        $region63: #{graph_sage_forward.1} parent=59 // pred_region
          %s1158 = sshra.s32 %s252, 3
          %s1159 = sand.u32 %s252, 7
          %s1160 = smul.addr %s1158, 4
          %s1161 = scalar_lea.vmem [#allocation2], %s1160
          %v1162 = vld [vmem:[%s1161] sm:$0xf]
          %v1163 = vld [vmem:[%s1161 + $0x4] sm:$0xf]
          %v1164 = vld [vmem:[%s1161 + $0x8] sm:$0xf]
          %v1165 = vld [vmem:[%s1161 + $0xc] sm:$0xf]
          %v1166 = vld [vmem:[%s1161 + $0x10] sm:$0xf]
          %v1167 = vld [vmem:[%s1161 + $0x14] sm:$0xf]
          %v1168 = vld [vmem:[%s1161 + $0x18] sm:$0xf]
          %v1169 = vld [vmem:[%s1161 + $0x1c] sm:$0xf]
          %v1170 = vld [vmem:[%s1161 + $0x20] sm:$0xf]
          %v1171 = vld [vmem:[%s1161 + $0x24] sm:$0xf]
          %v1172 = vld [vmem:[%s1161 + $0x28] sm:$0xf]
          %v1173 = vld [vmem:[%s1161 + $0x2c] sm:$0xf]
          %v1174 = vld [vmem:[%s1161 + $0x30] sm:$0xf]
          %v1175 = vld [vmem:[%s1161 + $0x34] sm:$0xf]
          %v1176 = vld [vmem:[%s1161 + $0x38] sm:$0xf]
          %v1177 = vld [vmem:[%s1161 + $0x3c] sm:$0xf]
          %v1178 = vld [vmem:[#allocation4] sm:$0xff]
          %v1179 = vld [vmem:[#allocation4 + $0x8] sm:$0xff]
          %v1180 = vld [vmem:[#allocation4 + $0x10] sm:$0xff]
          %v1181 = vld [vmem:[#allocation4 + $0x18] sm:$0xff]
          %v1182 = vld [vmem:[#allocation4 + $0x20] sm:$0xff]
          %v1183 = vld [vmem:[#allocation4 + $0x28] sm:$0xff]
          %v1184 = vld [vmem:[#allocation4 + $0x30] sm:$0xff]
          %v1185 = vld [vmem:[#allocation4 + $0x38] sm:$0xff]
          %v1186 = vld [vmem:[#allocation4 + $0x40] sm:$0xff]
          %v1187 = vld [vmem:[#allocation4 + $0x48] sm:$0xff]
          %v1188 = vld [vmem:[#allocation4 + $0x50] sm:$0xff]
          %v1189 = vld [vmem:[#allocation4 + $0x58] sm:$0xff]
          %v1190 = vld [vmem:[#allocation4 + $0x60] sm:$0xff]
          %v1191 = vld [vmem:[#allocation4 + $0x68] sm:$0xff]
          %v1192 = vld [vmem:[#allocation4 + $0x70] sm:$0xff]
          %v1193 = vld [vmem:[#allocation4 + $0x78] sm:$0xff]
          %v1194 = vpack.c.bf16 %v1179, %v1178
          %v1195 = vpack.c.bf16 %v1181, %v1180
          %v1196 = vpack.c.bf16 %v1183, %v1182
          %v1197 = vpack.c.bf16 %v1185, %v1184
          %v1198 = vpack.c.bf16 %v1187, %v1186
          %v1199 = vpack.c.bf16 %v1189, %v1188
          %v1200 = vpack.c.bf16 %v1191, %v1190
          %v1201 = vpack.c.bf16 %v1193, %v1192
          %s1202 = smul.u32 %s20, 2
          %s1203 = smul.u32 %s1202, 16
          %s1204 = smul.addr %s1203, 4
          %s1205 = scalar_lea.vmem %s2, %s1204
          %v1206 = vld [vmem:[%s1205] sm:$0xf]
          %v1207 = vld [vmem:[%s1205 + $0x4] sm:$0xf]
          %v1208 = vld [vmem:[%s1205 + $0x8] sm:$0xf]
          %v1209 = vld [vmem:[%s1205 + $0xc] sm:$0xf]
          %v1210 = vld [vmem:[%s1205 + $0x10] sm:$0xf]
          %v1211 = vld [vmem:[%s1205 + $0x14] sm:$0xf]
          %v1212 = vld [vmem:[%s1205 + $0x18] sm:$0xf]
          %v1213 = vld [vmem:[%s1205 + $0x1c] sm:$0xf]
          %v1214 = vld [vmem:[%s1205 + $0x20] sm:$0xf]
          %v1215 = vld [vmem:[%s1205 + $0x24] sm:$0xf]
          %v1216 = vld [vmem:[%s1205 + $0x28] sm:$0xf]
          %v1217 = vld [vmem:[%s1205 + $0x2c] sm:$0xf]
          %v1218 = vld [vmem:[%s1205 + $0x30] sm:$0xf]
          %v1219 = vld [vmem:[%s1205 + $0x34] sm:$0xf]
          %v1220 = vld [vmem:[%s1205 + $0x38] sm:$0xf]
          %v1221 = vld [vmem:[%s1205 + $0x3c] sm:$0xf]
          %s1222 = sadd.s32 %s1202, 1
          %s1223 = smul.u32 %s1222, 16
          %s1224 = smul.addr %s1223, 4
          %s1225 = scalar_lea.vmem %s2, %s1224
          %v1226 = vld [vmem:[%s1225] sm:$0xf]
          %v1227 = vld [vmem:[%s1225 + $0x4] sm:$0xf]
          %v1228 = vld [vmem:[%s1225 + $0x8] sm:$0xf]
          %v1229 = vld [vmem:[%s1225 + $0xc] sm:$0xf]
          %v1230 = vld [vmem:[%s1225 + $0x10] sm:$0xf]
          %v1231 = vld [vmem:[%s1225 + $0x14] sm:$0xf]
          %v1232 = vld [vmem:[%s1225 + $0x18] sm:$0xf]
          %v1233 = vld [vmem:[%s1225 + $0x1c] sm:$0xf]
          %v1234 = vld [vmem:[%s1225 + $0x20] sm:$0xf]
          %v1235 = vld [vmem:[%s1225 + $0x24] sm:$0xf]
          %v1236 = vld [vmem:[%s1225 + $0x28] sm:$0xf]
          %v1237 = vld [vmem:[%s1225 + $0x2c] sm:$0xf]
          %v1238 = vld [vmem:[%s1225 + $0x30] sm:$0xf]
          %v1239 = vld [vmem:[%s1225 + $0x34] sm:$0xf]
          %v1240 = vld [vmem:[%s1225 + $0x38] sm:$0xf]
          %v1241 = vld [vmem:[%s1225 + $0x3c] sm:$0xf]
          %v1258 = vunpack.c.l.b16 %v1162
          %v1259 = vunpack.c.l.b16 %v1163
          %v1260 = vunpack.c.l.b16 %v1164
          %v1261 = vunpack.c.l.b16 %v1165
          %v1262 = vunpack.c.l.b16 %v1166
          %v1263 = vunpack.c.l.b16 %v1167
          %v1264 = vunpack.c.l.b16 %v1168
          %v1265 = vunpack.c.l.b16 %v1169
          %v1266 = vunpack.c.l.b16 %v1170
          %v1267 = vunpack.c.l.b16 %v1171
          %v1268 = vunpack.c.l.b16 %v1172
          %v1269 = vunpack.c.l.b16 %v1173
          %v1270 = vunpack.c.l.b16 %v1174
          %v1271 = vunpack.c.l.b16 %v1175
          %v1272 = vunpack.c.l.b16 %v1176
          %v1273 = vunpack.c.l.b16 %v1177
          %v1274 = vpack.c.b16 %v1259, %v1258
          %v1275 = vpack.c.b16 %v1261, %v1260
          %v1276 = vpack.c.b16 %v1263, %v1262
          %v1277 = vpack.c.b16 %v1265, %v1264
          %v1278 = vpack.c.b16 %v1267, %v1266
          %v1279 = vpack.c.b16 %v1269, %v1268
          %v1280 = vpack.c.b16 %v1271, %v1270
          %v1281 = vpack.c.b16 %v1273, %v1272
          %v1306 = vunpack.c.l.b16 %v1226
          %v1307 = vunpack.c.l.b16 %v1227
          %v1308 = vunpack.c.l.b16 %v1228
          %v1309 = vunpack.c.l.b16 %v1229
          %v1310 = vunpack.c.l.b16 %v1230
          %v1311 = vunpack.c.l.b16 %v1231
          %v1312 = vunpack.c.l.b16 %v1232
          %v1313 = vunpack.c.l.b16 %v1233
          %v1314 = vunpack.c.l.b16 %v1234
          %v1315 = vunpack.c.l.b16 %v1235
          %v1316 = vunpack.c.l.b16 %v1236
          %v1317 = vunpack.c.l.b16 %v1237
          %v1318 = vunpack.c.l.b16 %v1238
          %v1319 = vunpack.c.l.b16 %v1239
          %v1320 = vunpack.c.l.b16 %v1240
          %v1321 = vunpack.c.l.b16 %v1241
          %v1322 = vpack.c.b16 %v1307, %v1306
          %v1323 = vpack.c.b16 %v1309, %v1308
          %v1324 = vpack.c.b16 %v1311, %v1310
          %v1325 = vpack.c.b16 %v1313, %v1312
          %v1326 = vpack.c.b16 %v1315, %v1314
          %v1327 = vpack.c.b16 %v1317, %v1316
          %v1328 = vpack.c.b16 %v1319, %v1318
          %v1329 = vpack.c.b16 %v1321, %v1320
          %1338 = vmatpush.bf16.msra.mxu0 %v1329
          %1339 = vmatpush.bf16.msra.mxu0 %v1328
          %1340 = vmatpush.bf16.msra.mxu0 %v1327
          %1341 = vmatpush.bf16.msra.mxu0 %v1326
          %1342 = vmatpush.bf16.msra.mxu0 %v1325
          %1343 = vmatpush.bf16.msra.mxu0 %v1324
          %1344 = vmatpush.bf16.msra.mxu0 %v1323
          %1345 = vmatpush.bf16.msra.mxu0 %v1322
          %1346 = vmatmul.bf16.gmra.mxu0 %v1274
          %v1347 = vpop.f32.mrf.mxu0
          %v1348 = vadd.f32 0.0, %v1347
          %v1349 = vpop.f32.mrf.mxu0
          %v1350 = vadd.f32 0.0, %v1349
          %1351 = vmatmul.bf16.gmra.mxu0 %v1275
          %v1352 = vpop.f32.mrf.mxu0
          %v1353 = vadd.f32 0.0, %v1352
          %v1354 = vpop.f32.mrf.mxu0
          %v1355 = vadd.f32 0.0, %v1354
          %1356 = vmatmul.bf16.gmra.mxu0 %v1276
          %v1357 = vpop.f32.mrf.mxu0
          %v1358 = vadd.f32 0.0, %v1357
          %v1359 = vpop.f32.mrf.mxu0
          %v1360 = vadd.f32 0.0, %v1359
          %1361 = vmatmul.bf16.gmra.mxu0 %v1277
          %v1362 = vpop.f32.mrf.mxu0
          %v1363 = vadd.f32 0.0, %v1362
          %v1364 = vpop.f32.mrf.mxu0
          %v1365 = vadd.f32 0.0, %v1364
          %1366 = vmatmul.bf16.gmra.mxu0 %v1278
          %v1367 = vpop.f32.mrf.mxu0
          %v1368 = vadd.f32 0.0, %v1367
          %v1369 = vpop.f32.mrf.mxu0
          %v1370 = vadd.f32 0.0, %v1369
          %1371 = vmatmul.bf16.gmra.mxu0 %v1279
          %v1372 = vpop.f32.mrf.mxu0
          %v1373 = vadd.f32 0.0, %v1372
          %v1374 = vpop.f32.mrf.mxu0
          %v1375 = vadd.f32 0.0, %v1374
          %1376 = vmatmul.bf16.gmra.mxu0 %v1280
          %v1377 = vpop.f32.mrf.mxu0
          %v1378 = vadd.f32 0.0, %v1377
          %v1379 = vpop.f32.mrf.mxu0
          %v1380 = vadd.f32 0.0, %v1379
          %1381 = vmatmul.bf16.gmra.mxu0 %v1281
          %v1382 = vpop.f32.mrf.mxu0
          %v1383 = vadd.f32 0.0, %v1382
          %v1384 = vpop.f32.mrf.mxu0
          %v1385 = vadd.f32 0.0, %v1384
          %1386 = vdwg.mxu0
          %v1403 = vunpack.c.l.b16 %v1206
          %v1404 = vunpack.c.l.b16 %v1207
          %v1405 = vunpack.c.l.b16 %v1208
          %v1406 = vunpack.c.l.b16 %v1209
          %v1407 = vunpack.c.l.b16 %v1210
          %v1408 = vunpack.c.l.b16 %v1211
          %v1409 = vunpack.c.l.b16 %v1212
          %v1410 = vunpack.c.l.b16 %v1213
          %v1411 = vunpack.c.l.b16 %v1214
          %v1412 = vunpack.c.l.b16 %v1215
          %v1413 = vunpack.c.l.b16 %v1216
          %v1414 = vunpack.c.l.b16 %v1217
          %v1415 = vunpack.c.l.b16 %v1218
          %v1416 = vunpack.c.l.b16 %v1219
          %v1417 = vunpack.c.l.b16 %v1220
          %v1418 = vunpack.c.l.b16 %v1221
          %v1419 = vpack.c.b16 %v1404, %v1403
          %v1420 = vpack.c.b16 %v1406, %v1405
          %v1421 = vpack.c.b16 %v1408, %v1407
          %v1422 = vpack.c.b16 %v1410, %v1409
          %v1423 = vpack.c.b16 %v1412, %v1411
          %v1424 = vpack.c.b16 %v1414, %v1413
          %v1425 = vpack.c.b16 %v1416, %v1415
          %v1426 = vpack.c.b16 %v1418, %v1417
          %1435 = vmatpush.bf16.msra.mxu0 %v1426
          %1436 = vmatpush.bf16.msra.mxu0 %v1425
          %1437 = vmatpush.bf16.msra.mxu0 %v1424
          %1438 = vmatpush.bf16.msra.mxu0 %v1423
          %1439 = vmatpush.bf16.msra.mxu0 %v1422
          %1440 = vmatpush.bf16.msra.mxu0 %v1421
          %1441 = vmatpush.bf16.msra.mxu0 %v1420
          %1442 = vmatpush.bf16.msra.mxu0 %v1419
          %1443 = vmatmul.bf16.gmra.mxu0 %v1194
          %v1444 = vpop.f32.mrf.mxu0
          %v1445 = vadd.f32 %v1348, %v1444
          %v1446 = vpop.f32.mrf.mxu0
          %v1447 = vadd.f32 %v1350, %v1446
          %1448 = vmatmul.bf16.gmra.mxu0 %v1195
          %v1449 = vpop.f32.mrf.mxu0
          %v1450 = vadd.f32 %v1353, %v1449
          %v1451 = vpop.f32.mrf.mxu0
          %v1452 = vadd.f32 %v1355, %v1451
          %1453 = vmatmul.bf16.gmra.mxu0 %v1196
          %v1454 = vpop.f32.mrf.mxu0
          %v1455 = vadd.f32 %v1358, %v1454
          %v1456 = vpop.f32.mrf.mxu0
          %v1457 = vadd.f32 %v1360, %v1456
          %1458 = vmatmul.bf16.gmra.mxu0 %v1197
          %v1459 = vpop.f32.mrf.mxu0
          %v1460 = vadd.f32 %v1363, %v1459
          %v1461 = vpop.f32.mrf.mxu0
          %v1462 = vadd.f32 %v1365, %v1461
          %1463 = vmatmul.bf16.gmra.mxu0 %v1198
          %v1464 = vpop.f32.mrf.mxu0
          %v1465 = vadd.f32 %v1368, %v1464
          %v1466 = vpop.f32.mrf.mxu0
          %v1467 = vadd.f32 %v1370, %v1466
          %1468 = vmatmul.bf16.gmra.mxu0 %v1199
          %v1469 = vpop.f32.mrf.mxu0
          %v1470 = vadd.f32 %v1373, %v1469
          %v1471 = vpop.f32.mrf.mxu0
          %v1472 = vadd.f32 %v1375, %v1471
          %1473 = vmatmul.bf16.gmra.mxu0 %v1200
          %v1474 = vpop.f32.mrf.mxu0
          %v1475 = vadd.f32 %v1378, %v1474
          %v1476 = vpop.f32.mrf.mxu0
          %v1477 = vadd.f32 %v1380, %v1476
          %1478 = vmatmul.bf16.gmra.mxu0 %v1201
          %v1479 = vpop.f32.mrf.mxu0
          %v1480 = vadd.f32 %v1383, %v1479
          %v1481 = vpop.f32.mrf.mxu0
          %v1482 = vadd.f32 %v1385, %v1481
          %1483 = vdwg.mxu0
          %s1484 = scalar_lea.vmem %s3, %s20
          %v1485 = vld [vmem:[%s1484] sm:$0x1]
          %v1487 = vperm.slane %v1485, 0
          %v1489 = vadd.f32 %v1445, %v1487
          %v1490 = vadd.f32 %v1447, %v1487
          %v1491 = vadd.f32 %v1450, %v1487
          %v1492 = vadd.f32 %v1452, %v1487
          %v1493 = vadd.f32 %v1455, %v1487
          %v1494 = vadd.f32 %v1457, %v1487
          %v1495 = vadd.f32 %v1460, %v1487
          %v1496 = vadd.f32 %v1462, %v1487
          %v1497 = vadd.f32 %v1465, %v1487
          %v1498 = vadd.f32 %v1467, %v1487
          %v1499 = vadd.f32 %v1470, %v1487
          %v1500 = vadd.f32 %v1472, %v1487
          %v1501 = vadd.f32 %v1475, %v1487
          %v1502 = vadd.f32 %v1477, %v1487
          %v1503 = vadd.f32 %v1480, %v1487
          %v1504 = vadd.f32 %v1482, %v1487
          %p1505 = scmp.lt.s32.totalorder %s20, 2
          // Predicated region
          $region65: #{graph_sage_forward.1} parent=63 // pred_check
            %p1506 = pneg %p1505
          $region66: #{graph_sage_forward.1} parent=63 // pred_check_branch
            %1508 = sbr.rel (%p1506) target = $region68
          $region67: #{graph_sage_forward.1} parent=63 // pred_region
            %v1509 = vmax.f32 %v1489, 0.0
            %v1510 = vmax.f32 %v1490, 0.0
            %v1511 = vmax.f32 %v1491, 0.0
            %v1512 = vmax.f32 %v1492, 0.0
            %v1513 = vmax.f32 %v1493, 0.0
            %v1514 = vmax.f32 %v1494, 0.0
            %v1515 = vmax.f32 %v1495, 0.0
            %v1516 = vmax.f32 %v1496, 0.0
            %v1517 = vmax.f32 %v1497, 0.0
            %v1518 = vmax.f32 %v1498, 0.0
            %v1519 = vmax.f32 %v1499, 0.0
            %v1520 = vmax.f32 %v1500, 0.0
            %v1521 = vmax.f32 %v1501, 0.0
            %v1522 = vmax.f32 %v1502, 0.0
            %v1523 = vmax.f32 %v1503, 0.0
            %v1524 = vmax.f32 %v1504, 0.0
            %v1525 = vpack.c.bf16 %v1509, %v1509
            %v1526 = vpack.c.bf16 %v1510, %v1510
            %v1527 = vpack.c.bf16 %v1511, %v1511
            %v1528 = vpack.c.bf16 %v1512, %v1512
            %v1529 = vpack.c.bf16 %v1513, %v1513
            %v1530 = vpack.c.bf16 %v1514, %v1514
            %v1531 = vpack.c.bf16 %v1515, %v1515
            %v1532 = vpack.c.bf16 %v1516, %v1516
            %v1533 = vpack.c.bf16 %v1517, %v1517
            %v1534 = vpack.c.bf16 %v1518, %v1518
            %v1535 = vpack.c.bf16 %v1519, %v1519
            %v1536 = vpack.c.bf16 %v1520, %v1520
            %v1537 = vpack.c.bf16 %v1521, %v1521
            %v1538 = vpack.c.bf16 %v1522, %v1522
            %v1539 = vpack.c.bf16 %v1523, %v1523
            %v1540 = vpack.c.bf16 %v1524, %v1524
            %s1541 = smul.addr %s1158, 4
            %s1542 = scalar_lea.vmem [#allocation3], %s1541
            %1543 = vst [vmem:[%s1542] sm:$0xf] %v1525
            %1544 = vst [vmem:[%s1542 + $0x4] sm:$0xf] %v1526
            %1545 = vst [vmem:[%s1542 + $0x8] sm:$0xf] %v1527
            %1546 = vst [vmem:[%s1542 + $0xc] sm:$0xf] %v1528
            %1547 = vst [vmem:[%s1542 + $0x10] sm:$0xf] %v1529
            %1548 = vst [vmem:[%s1542 + $0x14] sm:$0xf] %v1530
            %1549 = vst [vmem:[%s1542 + $0x18] sm:$0xf] %v1531
            %1550 = vst [vmem:[%s1542 + $0x1c] sm:$0xf] %v1532
            %1551 = vst [vmem:[%s1542 + $0x20] sm:$0xf] %v1533
            %1552 = vst [vmem:[%s1542 + $0x24] sm:$0xf] %v1534
            %1553 = vst [vmem:[%s1542 + $0x28] sm:$0xf] %v1535
            %1554 = vst [vmem:[%s1542 + $0x2c] sm:$0xf] %v1536
            %1555 = vst [vmem:[%s1542 + $0x30] sm:$0xf] %v1537
            %1556 = vst [vmem:[%s1542 + $0x34] sm:$0xf] %v1538
            %1557 = vst [vmem:[%s1542 + $0x38] sm:$0xf] %v1539
            %1558 = vst [vmem:[%s1542 + $0x3c] sm:$0xf] %v1540
          $region68: #{graph_sage_forward.1} parent=63 // pred_fallthru
            _
          %p1559 = scmp.eq.s32.totalorder %s20, 2
          // Predicated region
          $region69: #{graph_sage_forward.1} parent=63 // pred_check
            %p1560 = pneg %p1559
          $region70: #{graph_sage_forward.1} parent=63 // pred_check_branch
            %1562 = sbr.rel (%p1560) target = $region72
          $region71: #{graph_sage_forward.1} parent=63 // pred_region
            %1563 = vst [vmem:[%s229] sm:$0xff] %v1489
            %1564 = vst [vmem:[%s229 + $0x8] sm:$0xff] %v1490
            %1565 = vst [vmem:[%s229 + $0x10] sm:$0xff] %v1491
            %1566 = vst [vmem:[%s229 + $0x18] sm:$0xff] %v1492
            %1567 = vst [vmem:[%s229 + $0x20] sm:$0xff] %v1493
            %1568 = vst [vmem:[%s229 + $0x28] sm:$0xff] %v1494
            %1569 = vst [vmem:[%s229 + $0x30] sm:$0xff] %v1495
            %1570 = vst [vmem:[%s229 + $0x38] sm:$0xff] %v1496
            %1571 = vst [vmem:[%s229 + $0x40] sm:$0xff] %v1497
            %1572 = vst [vmem:[%s229 + $0x48] sm:$0xff] %v1498
            %1573 = vst [vmem:[%s229 + $0x50] sm:$0xff] %v1499
            %1574 = vst [vmem:[%s229 + $0x58] sm:$0xff] %v1500
            %1575 = vst [vmem:[%s229 + $0x60] sm:$0xff] %v1501
            %1576 = vst [vmem:[%s229 + $0x68] sm:$0xff] %v1502
            %1577 = vst [vmem:[%s229 + $0x70] sm:$0xff] %v1503
            %1578 = vst [vmem:[%s229 + $0x78] sm:$0xff] %v1504
          $region72: #{graph_sage_forward.1} parent=63 // pred_fallthru
            _
        $region64: #{graph_sage_forward.1} parent=59 // pred_fallthru
          _
      $region60: #{graph_sage_forward.1} parent=35 // pred_fallthru
        _
      %p1579 = scmp.gt.s32.totalorder %s20, 0
      %p1580 = scmp.eq.s32.totalorder %s921, 0
      %p1581 = pnand %p1579, %p1580
      %p1582 = pneg %p1581
      // Predicated region
      $region73: #{graph_sage_forward.1} parent=35 // pred_check
        _
      $region74: #{graph_sage_forward.1} parent=35 // pred_check_branch
        %1584 = sbr.rel (%p1581) target = $region76
      $region75: #{graph_sage_forward.1} parent=35 // pred_region
        %v1585 = vld [vmem:[#allocation4] sm:$0xff]
        %v1586 = vld [vmem:[#allocation4 + $0x8] sm:$0xff]
        %v1587 = vld [vmem:[#allocation4 + $0x10] sm:$0xff]
        %v1588 = vld [vmem:[#allocation4 + $0x18] sm:$0xff]
        %v1589 = vld [vmem:[#allocation4 + $0x20] sm:$0xff]
        %v1590 = vld [vmem:[#allocation4 + $0x28] sm:$0xff]
        %v1591 = vld [vmem:[#allocation4 + $0x30] sm:$0xff]
        %v1592 = vld [vmem:[#allocation4 + $0x38] sm:$0xff]
        %v1593 = vld [vmem:[#allocation4 + $0x40] sm:$0xff]
        %v1594 = vld [vmem:[#allocation4 + $0x48] sm:$0xff]
        %v1595 = vld [vmem:[#allocation4 + $0x50] sm:$0xff]
        %v1596 = vld [vmem:[#allocation4 + $0x58] sm:$0xff]
        %v1597 = vld [vmem:[#allocation4 + $0x60] sm:$0xff]
        %v1598 = vld [vmem:[#allocation4 + $0x68] sm:$0xff]
        %v1599 = vld [vmem:[#allocation4 + $0x70] sm:$0xff]
        %v1600 = vld [vmem:[#allocation4 + $0x78] sm:$0xff]
        %v1601 = vld [vmem:[%s223] sm:$0xf]
        %v1602 = vld [vmem:[%s223 + $0x4] sm:$0xf]
        %v1603 = vld [vmem:[%s223 + $0x8] sm:$0xf]
        %v1604 = vld [vmem:[%s223 + $0xc] sm:$0xf]
        %v1605 = vld [vmem:[%s223 + $0x10] sm:$0xf]
        %v1606 = vld [vmem:[%s223 + $0x14] sm:$0xf]
        %v1607 = vld [vmem:[%s223 + $0x18] sm:$0xf]
        %v1608 = vld [vmem:[%s223 + $0x1c] sm:$0xf]
        %v1609 = vld [vmem:[%s223 + $0x20] sm:$0xf]
        %v1610 = vld [vmem:[%s223 + $0x24] sm:$0xf]
        %v1611 = vld [vmem:[%s223 + $0x28] sm:$0xf]
        %v1612 = vld [vmem:[%s223 + $0x2c] sm:$0xf]
        %v1613 = vld [vmem:[%s223 + $0x30] sm:$0xf]
        %v1614 = vld [vmem:[%s223 + $0x34] sm:$0xf]
        %v1615 = vld [vmem:[%s223 + $0x38] sm:$0xf]
        %v1616 = vld [vmem:[%s223 + $0x3c] sm:$0xf]
        %s1617 = sshra.s32 %s251, 3
        %s1618 = sand.u32 %s251, 7
        %s1619 = smul.addr %s1617, 4
        %s1620 = scalar_lea.vmem [#allocation3], %s1619
        %v1621 = vld [vmem:[%s1620] sm:$0xf]
        %v1622 = vld [vmem:[%s1620 + $0x4] sm:$0xf]
        %v1623 = vld [vmem:[%s1620 + $0x8] sm:$0xf]
        %v1624 = vld [vmem:[%s1620 + $0xc] sm:$0xf]
        %v1625 = vld [vmem:[%s1620 + $0x10] sm:$0xf]
        %v1626 = vld [vmem:[%s1620 + $0x14] sm:$0xf]
        %v1627 = vld [vmem:[%s1620 + $0x18] sm:$0xf]
        %v1628 = vld [vmem:[%s1620 + $0x1c] sm:$0xf]
        %v1629 = vld [vmem:[%s1620 + $0x20] sm:$0xf]
        %v1630 = vld [vmem:[%s1620 + $0x24] sm:$0xf]
        %v1631 = vld [vmem:[%s1620 + $0x28] sm:$0xf]
        %v1632 = vld [vmem:[%s1620 + $0x2c] sm:$0xf]
        %v1633 = vld [vmem:[%s1620 + $0x30] sm:$0xf]
        %v1634 = vld [vmem:[%s1620 + $0x34] sm:$0xf]
        %v1635 = vld [vmem:[%s1620 + $0x38] sm:$0xf]
        %v1636 = vld [vmem:[%s1620 + $0x3c] sm:$0xf]
        %v1653 = vunpack.c.l.b16 %v1601
        %v1654 = vunpack.c.l.b16 %v1602
        %v1655 = vunpack.c.l.b16 %v1603
        %v1656 = vunpack.c.l.b16 %v1604
        %v1657 = vunpack.c.l.b16 %v1605
        %v1658 = vunpack.c.l.b16 %v1606
        %v1659 = vunpack.c.l.b16 %v1607
        %v1660 = vunpack.c.l.b16 %v1608
        %v1661 = vunpack.c.l.b16 %v1609
        %v1662 = vunpack.c.l.b16 %v1610
        %v1663 = vunpack.c.l.b16 %v1611
        %v1664 = vunpack.c.l.b16 %v1612
        %v1665 = vunpack.c.l.b16 %v1613
        %v1666 = vunpack.c.l.b16 %v1614
        %v1667 = vunpack.c.l.b16 %v1615
        %v1668 = vunpack.c.l.b16 %v1616
        %v1669 = vpack.c.b16 %v1654, %v1653
        %v1670 = vpack.c.b16 %v1656, %v1655
        %v1671 = vpack.c.b16 %v1658, %v1657
        %v1672 = vpack.c.b16 %v1660, %v1659
        %v1673 = vpack.c.b16 %v1662, %v1661
        %v1674 = vpack.c.b16 %v1664, %v1663
        %v1675 = vpack.c.b16 %v1666, %v1665
        %v1676 = vpack.c.b16 %v1668, %v1667
        %v1701 = vunpack.c.l.b16 %v1621
        %v1702 = vunpack.c.l.b16 %v1622
        %v1703 = vunpack.c.l.b16 %v1623
        %v1704 = vunpack.c.l.b16 %v1624
        %v1705 = vunpack.c.l.b16 %v1625
        %v1706 = vunpack.c.l.b16 %v1626
        %v1707 = vunpack.c.l.b16 %v1627
        %v1708 = vunpack.c.l.b16 %v1628
        %v1709 = vunpack.c.l.b16 %v1629
        %v1710 = vunpack.c.l.b16 %v1630
        %v1711 = vunpack.c.l.b16 %v1631
        %v1712 = vunpack.c.l.b16 %v1632
        %v1713 = vunpack.c.l.b16 %v1633
        %v1714 = vunpack.c.l.b16 %v1634
        %v1715 = vunpack.c.l.b16 %v1635
        %v1716 = vunpack.c.l.b16 %v1636
        %v1717 = vpack.c.b16 %v1702, %v1701
        %v1718 = vpack.c.b16 %v1704, %v1703
        %v1719 = vpack.c.b16 %v1706, %v1705
        %v1720 = vpack.c.b16 %v1708, %v1707
        %v1721 = vpack.c.b16 %v1710, %v1709
        %v1722 = vpack.c.b16 %v1712, %v1711
        %v1723 = vpack.c.b16 %v1714, %v1713
        %v1724 = vpack.c.b16 %v1716, %v1715
        %1733 = vmatpush.bf16.msra.mxu0 %v1724
        %1734 = vmatpush.bf16.msra.mxu0 %v1723
        %1735 = vmatpush.bf16.msra.mxu0 %v1722
        %1736 = vmatpush.bf16.msra.mxu0 %v1721
        %1737 = vmatpush.bf16.msra.mxu0 %v1720
        %1738 = vmatpush.bf16.msra.mxu0 %v1719
        %1739 = vmatpush.bf16.msra.mxu0 %v1718
        %1740 = vmatpush.bf16.msra.mxu0 %v1717
        %1741 = vmatmul.bf16.gmra.mxu0 %v1669
        %v1742 = vpop.f32.mrf.mxu0
        %v1743 = vadd.f32 0.0, %v1742
        %v1744 = vpop.f32.mrf.mxu0
        %v1745 = vadd.f32 0.0, %v1744
        %1746 = vmatmul.bf16.gmra.mxu0 %v1670
        %v1747 = vpop.f32.mrf.mxu0
        %v1748 = vadd.f32 0.0, %v1747
        %v1749 = vpop.f32.mrf.mxu0
        %v1750 = vadd.f32 0.0, %v1749
        %1751 = vmatmul.bf16.gmra.mxu0 %v1671
        %v1752 = vpop.f32.mrf.mxu0
        %v1753 = vadd.f32 0.0, %v1752
        %v1754 = vpop.f32.mrf.mxu0
        %v1755 = vadd.f32 0.0, %v1754
        %1756 = vmatmul.bf16.gmra.mxu0 %v1672
        %v1757 = vpop.f32.mrf.mxu0
        %v1758 = vadd.f32 0.0, %v1757
        %v1759 = vpop.f32.mrf.mxu0
        %v1760 = vadd.f32 0.0, %v1759
        %1761 = vmatmul.bf16.gmra.mxu0 %v1673
        %v1762 = vpop.f32.mrf.mxu0
        %v1763 = vadd.f32 0.0, %v1762
        %v1764 = vpop.f32.mrf.mxu0
        %v1765 = vadd.f32 0.0, %v1764
        %1766 = vmatmul.bf16.gmra.mxu0 %v1674
        %v1767 = vpop.f32.mrf.mxu0
        %v1768 = vadd.f32 0.0, %v1767
        %v1769 = vpop.f32.mrf.mxu0
        %v1770 = vadd.f32 0.0, %v1769
        %1771 = vmatmul.bf16.gmra.mxu0 %v1675
        %v1772 = vpop.f32.mrf.mxu0
        %v1773 = vadd.f32 0.0, %v1772
        %v1774 = vpop.f32.mrf.mxu0
        %v1775 = vadd.f32 0.0, %v1774
        %1776 = vmatmul.bf16.gmra.mxu0 %v1676
        %v1777 = vpop.f32.mrf.mxu0
        %v1778 = vadd.f32 0.0, %v1777
        %v1779 = vpop.f32.mrf.mxu0
        %v1780 = vadd.f32 0.0, %v1779
        %1781 = vdwg.mxu0
        %v1782 = vadd.f32 %v1585, %v1743
        %v1783 = vadd.f32 %v1586, %v1745
        %v1784 = vadd.f32 %v1587, %v1748
        %v1785 = vadd.f32 %v1588, %v1750
        %v1786 = vadd.f32 %v1589, %v1753
        %v1787 = vadd.f32 %v1590, %v1755
        %v1788 = vadd.f32 %v1591, %v1758
        %v1789 = vadd.f32 %v1592, %v1760
        %v1790 = vadd.f32 %v1593, %v1763
        %v1791 = vadd.f32 %v1594, %v1765
        %v1792 = vadd.f32 %v1595, %v1768
        %v1793 = vadd.f32 %v1596, %v1770
        %v1794 = vadd.f32 %v1597, %v1773
        %v1795 = vadd.f32 %v1598, %v1775
        %v1796 = vadd.f32 %v1599, %v1778
        %v1797 = vadd.f32 %v1600, %v1780
        %1798 = vst [vmem:[#allocation4] sm:$0xff] %v1782
        %1799 = vst [vmem:[#allocation4 + $0x8] sm:$0xff] %v1783
        %1800 = vst [vmem:[#allocation4 + $0x10] sm:$0xff] %v1784
        %1801 = vst [vmem:[#allocation4 + $0x18] sm:$0xff] %v1785
        %1802 = vst [vmem:[#allocation4 + $0x20] sm:$0xff] %v1786
        %1803 = vst [vmem:[#allocation4 + $0x28] sm:$0xff] %v1787
        %1804 = vst [vmem:[#allocation4 + $0x30] sm:$0xff] %v1788
        %1805 = vst [vmem:[#allocation4 + $0x38] sm:$0xff] %v1789
        %1806 = vst [vmem:[#allocation4 + $0x40] sm:$0xff] %v1790
        %1807 = vst [vmem:[#allocation4 + $0x48] sm:$0xff] %v1791
        %1808 = vst [vmem:[#allocation4 + $0x50] sm:$0xff] %v1792
        %1809 = vst [vmem:[#allocation4 + $0x58] sm:$0xff] %v1793
        %1810 = vst [vmem:[#allocation4 + $0x60] sm:$0xff] %v1794
        %1811 = vst [vmem:[#allocation4 + $0x68] sm:$0xff] %v1795
        %1812 = vst [vmem:[#allocation4 + $0x70] sm:$0xff] %v1796
        %1813 = vst [vmem:[#allocation4 + $0x78] sm:$0xff] %v1797
        // Predicated region
        $region77: #{graph_sage_forward.1} parent=75 // pred_check
          %p1814 = pneg %p231
        $region78: #{graph_sage_forward.1} parent=75 // pred_check_branch
          %1816 = sbr.rel (%p1814) target = $region80
        $region79: #{graph_sage_forward.1} parent=75 // pred_region
          %s1817 = sshra.s32 %s252, 3
          %s1818 = sand.u32 %s252, 7
          %s1819 = smul.addr %s1817, 4
          %s1820 = scalar_lea.vmem [#allocation3], %s1819
          %v1821 = vld [vmem:[%s1820] sm:$0xf]
          %v1822 = vld [vmem:[%s1820 + $0x4] sm:$0xf]
          %v1823 = vld [vmem:[%s1820 + $0x8] sm:$0xf]
          %v1824 = vld [vmem:[%s1820 + $0xc] sm:$0xf]
          %v1825 = vld [vmem:[%s1820 + $0x10] sm:$0xf]
          %v1826 = vld [vmem:[%s1820 + $0x14] sm:$0xf]
          %v1827 = vld [vmem:[%s1820 + $0x18] sm:$0xf]
          %v1828 = vld [vmem:[%s1820 + $0x1c] sm:$0xf]
          %v1829 = vld [vmem:[%s1820 + $0x20] sm:$0xf]
          %v1830 = vld [vmem:[%s1820 + $0x24] sm:$0xf]
          %v1831 = vld [vmem:[%s1820 + $0x28] sm:$0xf]
          %v1832 = vld [vmem:[%s1820 + $0x2c] sm:$0xf]
          %v1833 = vld [vmem:[%s1820 + $0x30] sm:$0xf]
          %v1834 = vld [vmem:[%s1820 + $0x34] sm:$0xf]
          %v1835 = vld [vmem:[%s1820 + $0x38] sm:$0xf]
          %v1836 = vld [vmem:[%s1820 + $0x3c] sm:$0xf]
          %v1837 = vld [vmem:[#allocation4] sm:$0xff]
          %v1838 = vld [vmem:[#allocation4 + $0x8] sm:$0xff]
          %v1839 = vld [vmem:[#allocation4 + $0x10] sm:$0xff]
          %v1840 = vld [vmem:[#allocation4 + $0x18] sm:$0xff]
          %v1841 = vld [vmem:[#allocation4 + $0x20] sm:$0xff]
          %v1842 = vld [vmem:[#allocation4 + $0x28] sm:$0xff]
          %v1843 = vld [vmem:[#allocation4 + $0x30] sm:$0xff]
          %v1844 = vld [vmem:[#allocation4 + $0x38] sm:$0xff]
          %v1845 = vld [vmem:[#allocation4 + $0x40] sm:$0xff]
          %v1846 = vld [vmem:[#allocation4 + $0x48] sm:$0xff]
          %v1847 = vld [vmem:[#allocation4 + $0x50] sm:$0xff]
          %v1848 = vld [vmem:[#allocation4 + $0x58] sm:$0xff]
          %v1849 = vld [vmem:[#allocation4 + $0x60] sm:$0xff]
          %v1850 = vld [vmem:[#allocation4 + $0x68] sm:$0xff]
          %v1851 = vld [vmem:[#allocation4 + $0x70] sm:$0xff]
          %v1852 = vld [vmem:[#allocation4 + $0x78] sm:$0xff]
          %v1853 = vpack.c.bf16 %v1838, %v1837
          %v1854 = vpack.c.bf16 %v1840, %v1839
          %v1855 = vpack.c.bf16 %v1842, %v1841
          %v1856 = vpack.c.bf16 %v1844, %v1843
          %v1857 = vpack.c.bf16 %v1846, %v1845
          %v1858 = vpack.c.bf16 %v1848, %v1847
          %v1859 = vpack.c.bf16 %v1850, %v1849
          %v1860 = vpack.c.bf16 %v1852, %v1851
          %s1861 = smul.u32 %s20, 2
          %s1862 = smul.u32 %s1861, 16
          %s1863 = smul.addr %s1862, 4
          %s1864 = scalar_lea.vmem %s2, %s1863
          %v1865 = vld [vmem:[%s1864] sm:$0xf]
          %v1866 = vld [vmem:[%s1864 + $0x4] sm:$0xf]
          %v1867 = vld [vmem:[%s1864 + $0x8] sm:$0xf]
          %v1868 = vld [vmem:[%s1864 + $0xc] sm:$0xf]
          %v1869 = vld [vmem:[%s1864 + $0x10] sm:$0xf]
          %v1870 = vld [vmem:[%s1864 + $0x14] sm:$0xf]
          %v1871 = vld [vmem:[%s1864 + $0x18] sm:$0xf]
          %v1872 = vld [vmem:[%s1864 + $0x1c] sm:$0xf]
          %v1873 = vld [vmem:[%s1864 + $0x20] sm:$0xf]
          %v1874 = vld [vmem:[%s1864 + $0x24] sm:$0xf]
          %v1875 = vld [vmem:[%s1864 + $0x28] sm:$0xf]
          %v1876 = vld [vmem:[%s1864 + $0x2c] sm:$0xf]
          %v1877 = vld [vmem:[%s1864 + $0x30] sm:$0xf]
          %v1878 = vld [vmem:[%s1864 + $0x34] sm:$0xf]
          %v1879 = vld [vmem:[%s1864 + $0x38] sm:$0xf]
          %v1880 = vld [vmem:[%s1864 + $0x3c] sm:$0xf]
          %s1881 = sadd.s32 %s1861, 1
          %s1882 = smul.u32 %s1881, 16
          %s1883 = smul.addr %s1882, 4
          %s1884 = scalar_lea.vmem %s2, %s1883
          %v1885 = vld [vmem:[%s1884] sm:$0xf]
          %v1886 = vld [vmem:[%s1884 + $0x4] sm:$0xf]
          %v1887 = vld [vmem:[%s1884 + $0x8] sm:$0xf]
          %v1888 = vld [vmem:[%s1884 + $0xc] sm:$0xf]
          %v1889 = vld [vmem:[%s1884 + $0x10] sm:$0xf]
          %v1890 = vld [vmem:[%s1884 + $0x14] sm:$0xf]
          %v1891 = vld [vmem:[%s1884 + $0x18] sm:$0xf]
          %v1892 = vld [vmem:[%s1884 + $0x1c] sm:$0xf]
          %v1893 = vld [vmem:[%s1884 + $0x20] sm:$0xf]
          %v1894 = vld [vmem:[%s1884 + $0x24] sm:$0xf]
          %v1895 = vld [vmem:[%s1884 + $0x28] sm:$0xf]
          %v1896 = vld [vmem:[%s1884 + $0x2c] sm:$0xf]
          %v1897 = vld [vmem:[%s1884 + $0x30] sm:$0xf]
          %v1898 = vld [vmem:[%s1884 + $0x34] sm:$0xf]
          %v1899 = vld [vmem:[%s1884 + $0x38] sm:$0xf]
          %v1900 = vld [vmem:[%s1884 + $0x3c] sm:$0xf]
          %v1917 = vunpack.c.l.b16 %v1821
          %v1918 = vunpack.c.l.b16 %v1822
          %v1919 = vunpack.c.l.b16 %v1823
          %v1920 = vunpack.c.l.b16 %v1824
          %v1921 = vunpack.c.l.b16 %v1825
          %v1922 = vunpack.c.l.b16 %v1826
          %v1923 = vunpack.c.l.b16 %v1827
          %v1924 = vunpack.c.l.b16 %v1828
          %v1925 = vunpack.c.l.b16 %v1829
          %v1926 = vunpack.c.l.b16 %v1830
          %v1927 = vunpack.c.l.b16 %v1831
          %v1928 = vunpack.c.l.b16 %v1832
          %v1929 = vunpack.c.l.b16 %v1833
          %v1930 = vunpack.c.l.b16 %v1834
          %v1931 = vunpack.c.l.b16 %v1835
          %v1932 = vunpack.c.l.b16 %v1836
          %v1933 = vpack.c.b16 %v1918, %v1917
          %v1934 = vpack.c.b16 %v1920, %v1919
          %v1935 = vpack.c.b16 %v1922, %v1921
          %v1936 = vpack.c.b16 %v1924, %v1923
          %v1937 = vpack.c.b16 %v1926, %v1925
          %v1938 = vpack.c.b16 %v1928, %v1927
          %v1939 = vpack.c.b16 %v1930, %v1929
          %v1940 = vpack.c.b16 %v1932, %v1931
          %v1965 = vunpack.c.l.b16 %v1885
          %v1966 = vunpack.c.l.b16 %v1886
          %v1967 = vunpack.c.l.b16 %v1887
          %v1968 = vunpack.c.l.b16 %v1888
          %v1969 = vunpack.c.l.b16 %v1889
          %v1970 = vunpack.c.l.b16 %v1890
          %v1971 = vunpack.c.l.b16 %v1891
          %v1972 = vunpack.c.l.b16 %v1892
          %v1973 = vunpack.c.l.b16 %v1893
          %v1974 = vunpack.c.l.b16 %v1894
          %v1975 = vunpack.c.l.b16 %v1895
          %v1976 = vunpack.c.l.b16 %v1896
          %v1977 = vunpack.c.l.b16 %v1897
          %v1978 = vunpack.c.l.b16 %v1898
          %v1979 = vunpack.c.l.b16 %v1899
          %v1980 = vunpack.c.l.b16 %v1900
          %v1981 = vpack.c.b16 %v1966, %v1965
          %v1982 = vpack.c.b16 %v1968, %v1967
          %v1983 = vpack.c.b16 %v1970, %v1969
          %v1984 = vpack.c.b16 %v1972, %v1971
          %v1985 = vpack.c.b16 %v1974, %v1973
          %v1986 = vpack.c.b16 %v1976, %v1975
          %v1987 = vpack.c.b16 %v1978, %v1977
          %v1988 = vpack.c.b16 %v1980, %v1979
          %1997 = vmatpush.bf16.msra.mxu0 %v1988
          %1998 = vmatpush.bf16.msra.mxu0 %v1987
          %1999 = vmatpush.bf16.msra.mxu0 %v1986
          %2000 = vmatpush.bf16.msra.mxu0 %v1985
          %2001 = vmatpush.bf16.msra.mxu0 %v1984
          %2002 = vmatpush.bf16.msra.mxu0 %v1983
          %2003 = vmatpush.bf16.msra.mxu0 %v1982
          %2004 = vmatpush.bf16.msra.mxu0 %v1981
          %2005 = vmatmul.bf16.gmra.mxu0 %v1933
          %v2006 = vpop.f32.mrf.mxu0
          %v2007 = vadd.f32 0.0, %v2006
          %v2008 = vpop.f32.mrf.mxu0
          %v2009 = vadd.f32 0.0, %v2008
          %2010 = vmatmul.bf16.gmra.mxu0 %v1934
          %v2011 = vpop.f32.mrf.mxu0
          %v2012 = vadd.f32 0.0, %v2011
          %v2013 = vpop.f32.mrf.mxu0
          %v2014 = vadd.f32 0.0, %v2013
          %2015 = vmatmul.bf16.gmra.mxu0 %v1935
          %v2016 = vpop.f32.mrf.mxu0
          %v2017 = vadd.f32 0.0, %v2016
          %v2018 = vpop.f32.mrf.mxu0
          %v2019 = vadd.f32 0.0, %v2018
          %2020 = vmatmul.bf16.gmra.mxu0 %v1936
          %v2021 = vpop.f32.mrf.mxu0
          %v2022 = vadd.f32 0.0, %v2021
          %v2023 = vpop.f32.mrf.mxu0
          %v2024 = vadd.f32 0.0, %v2023
          %2025 = vmatmul.bf16.gmra.mxu0 %v1937
          %v2026 = vpop.f32.mrf.mxu0
          %v2027 = vadd.f32 0.0, %v2026
          %v2028 = vpop.f32.mrf.mxu0
          %v2029 = vadd.f32 0.0, %v2028
          %2030 = vmatmul.bf16.gmra.mxu0 %v1938
          %v2031 = vpop.f32.mrf.mxu0
          %v2032 = vadd.f32 0.0, %v2031
          %v2033 = vpop.f32.mrf.mxu0
          %v2034 = vadd.f32 0.0, %v2033
          %2035 = vmatmul.bf16.gmra.mxu0 %v1939
          %v2036 = vpop.f32.mrf.mxu0
          %v2037 = vadd.f32 0.0, %v2036
          %v2038 = vpop.f32.mrf.mxu0
          %v2039 = vadd.f32 0.0, %v2038
          %2040 = vmatmul.bf16.gmra.mxu0 %v1940
          %v2041 = vpop.f32.mrf.mxu0
          %v2042 = vadd.f32 0.0, %v2041
          %v2043 = vpop.f32.mrf.mxu0
          %v2044 = vadd.f32 0.0, %v2043
          %2045 = vdwg.mxu0
          %v2062 = vunpack.c.l.b16 %v1865
          %v2063 = vunpack.c.l.b16 %v1866
          %v2064 = vunpack.c.l.b16 %v1867
          %v2065 = vunpack.c.l.b16 %v1868
          %v2066 = vunpack.c.l.b16 %v1869
          %v2067 = vunpack.c.l.b16 %v1870
          %v2068 = vunpack.c.l.b16 %v1871
          %v2069 = vunpack.c.l.b16 %v1872
          %v2070 = vunpack.c.l.b16 %v1873
          %v2071 = vunpack.c.l.b16 %v1874
          %v2072 = vunpack.c.l.b16 %v1875
          %v2073 = vunpack.c.l.b16 %v1876
          %v2074 = vunpack.c.l.b16 %v1877
          %v2075 = vunpack.c.l.b16 %v1878
          %v2076 = vunpack.c.l.b16 %v1879
          %v2077 = vunpack.c.l.b16 %v1880
          %v2078 = vpack.c.b16 %v2063, %v2062
          %v2079 = vpack.c.b16 %v2065, %v2064
          %v2080 = vpack.c.b16 %v2067, %v2066
          %v2081 = vpack.c.b16 %v2069, %v2068
          %v2082 = vpack.c.b16 %v2071, %v2070
          %v2083 = vpack.c.b16 %v2073, %v2072
          %v2084 = vpack.c.b16 %v2075, %v2074
          %v2085 = vpack.c.b16 %v2077, %v2076
          %2094 = vmatpush.bf16.msra.mxu0 %v2085
          %2095 = vmatpush.bf16.msra.mxu0 %v2084
          %2096 = vmatpush.bf16.msra.mxu0 %v2083
          %2097 = vmatpush.bf16.msra.mxu0 %v2082
          %2098 = vmatpush.bf16.msra.mxu0 %v2081
          %2099 = vmatpush.bf16.msra.mxu0 %v2080
          %2100 = vmatpush.bf16.msra.mxu0 %v2079
          %2101 = vmatpush.bf16.msra.mxu0 %v2078
          %2102 = vmatmul.bf16.gmra.mxu0 %v1853
          %v2103 = vpop.f32.mrf.mxu0
          %v2104 = vadd.f32 %v2007, %v2103
          %v2105 = vpop.f32.mrf.mxu0
          %v2106 = vadd.f32 %v2009, %v2105
          %2107 = vmatmul.bf16.gmra.mxu0 %v1854
          %v2108 = vpop.f32.mrf.mxu0
          %v2109 = vadd.f32 %v2012, %v2108
          %v2110 = vpop.f32.mrf.mxu0
          %v2111 = vadd.f32 %v2014, %v2110
          %2112 = vmatmul.bf16.gmra.mxu0 %v1855
          %v2113 = vpop.f32.mrf.mxu0
          %v2114 = vadd.f32 %v2017, %v2113
          %v2115 = vpop.f32.mrf.mxu0
          %v2116 = vadd.f32 %v2019, %v2115
          %2117 = vmatmul.bf16.gmra.mxu0 %v1856
          %v2118 = vpop.f32.mrf.mxu0
          %v2119 = vadd.f32 %v2022, %v2118
          %v2120 = vpop.f32.mrf.mxu0
          %v2121 = vadd.f32 %v2024, %v2120
          %2122 = vmatmul.bf16.gmra.mxu0 %v1857
          %v2123 = vpop.f32.mrf.mxu0
          %v2124 = vadd.f32 %v2027, %v2123
          %v2125 = vpop.f32.mrf.mxu0
          %v2126 = vadd.f32 %v2029, %v2125
          %2127 = vmatmul.bf16.gmra.mxu0 %v1858
          %v2128 = vpop.f32.mrf.mxu0
          %v2129 = vadd.f32 %v2032, %v2128
          %v2130 = vpop.f32.mrf.mxu0
          %v2131 = vadd.f32 %v2034, %v2130
          %2132 = vmatmul.bf16.gmra.mxu0 %v1859
          %v2133 = vpop.f32.mrf.mxu0
          %v2134 = vadd.f32 %v2037, %v2133
          %v2135 = vpop.f32.mrf.mxu0
          %v2136 = vadd.f32 %v2039, %v2135
          %2137 = vmatmul.bf16.gmra.mxu0 %v1860
          %v2138 = vpop.f32.mrf.mxu0
          %v2139 = vadd.f32 %v2042, %v2138
          %v2140 = vpop.f32.mrf.mxu0
          %v2141 = vadd.f32 %v2044, %v2140
          %2142 = vdwg.mxu0
          %s2143 = scalar_lea.vmem %s3, %s20
          %v2144 = vld [vmem:[%s2143] sm:$0x1]
          %v2146 = vperm.slane %v2144, 0
          %v2148 = vadd.f32 %v2104, %v2146
          %v2149 = vadd.f32 %v2106, %v2146
          %v2150 = vadd.f32 %v2109, %v2146
          %v2151 = vadd.f32 %v2111, %v2146
          %v2152 = vadd.f32 %v2114, %v2146
          %v2153 = vadd.f32 %v2116, %v2146
          %v2154 = vadd.f32 %v2119, %v2146
          %v2155 = vadd.f32 %v2121, %v2146
          %v2156 = vadd.f32 %v2124, %v2146
          %v2157 = vadd.f32 %v2126, %v2146
          %v2158 = vadd.f32 %v2129, %v2146
          %v2159 = vadd.f32 %v2131, %v2146
          %v2160 = vadd.f32 %v2134, %v2146
          %v2161 = vadd.f32 %v2136, %v2146
          %v2162 = vadd.f32 %v2139, %v2146
          %v2163 = vadd.f32 %v2141, %v2146
          %p2164 = scmp.lt.s32.totalorder %s20, 2
          // Predicated region
          $region81: #{graph_sage_forward.1} parent=79 // pred_check
            %p2165 = pneg %p2164
          $region82: #{graph_sage_forward.1} parent=79 // pred_check_branch
            %2167 = sbr.rel (%p2165) target = $region84
          $region83: #{graph_sage_forward.1} parent=79 // pred_region
            %v2168 = vmax.f32 %v2148, 0.0
            %v2169 = vmax.f32 %v2149, 0.0
            %v2170 = vmax.f32 %v2150, 0.0
            %v2171 = vmax.f32 %v2151, 0.0
            %v2172 = vmax.f32 %v2152, 0.0
            %v2173 = vmax.f32 %v2153, 0.0
            %v2174 = vmax.f32 %v2154, 0.0
            %v2175 = vmax.f32 %v2155, 0.0
            %v2176 = vmax.f32 %v2156, 0.0
            %v2177 = vmax.f32 %v2157, 0.0
            %v2178 = vmax.f32 %v2158, 0.0
            %v2179 = vmax.f32 %v2159, 0.0
            %v2180 = vmax.f32 %v2160, 0.0
            %v2181 = vmax.f32 %v2161, 0.0
            %v2182 = vmax.f32 %v2162, 0.0
            %v2183 = vmax.f32 %v2163, 0.0
            %v2184 = vpack.c.bf16 %v2168, %v2168
            %v2185 = vpack.c.bf16 %v2169, %v2169
            %v2186 = vpack.c.bf16 %v2170, %v2170
            %v2187 = vpack.c.bf16 %v2171, %v2171
            %v2188 = vpack.c.bf16 %v2172, %v2172
            %v2189 = vpack.c.bf16 %v2173, %v2173
            %v2190 = vpack.c.bf16 %v2174, %v2174
            %v2191 = vpack.c.bf16 %v2175, %v2175
            %v2192 = vpack.c.bf16 %v2176, %v2176
            %v2193 = vpack.c.bf16 %v2177, %v2177
            %v2194 = vpack.c.bf16 %v2178, %v2178
            %v2195 = vpack.c.bf16 %v2179, %v2179
            %v2196 = vpack.c.bf16 %v2180, %v2180
            %v2197 = vpack.c.bf16 %v2181, %v2181
            %v2198 = vpack.c.bf16 %v2182, %v2182
            %v2199 = vpack.c.bf16 %v2183, %v2183
            %s2200 = smul.addr %s1817, 4
            %s2201 = scalar_lea.vmem [#allocation2], %s2200
            %2202 = vst [vmem:[%s2201] sm:$0xf] %v2184
            %2203 = vst [vmem:[%s2201 + $0x4] sm:$0xf] %v2185
            %2204 = vst [vmem:[%s2201 + $0x8] sm:$0xf] %v2186
            %2205 = vst [vmem:[%s2201 + $0xc] sm:$0xf] %v2187
            %2206 = vst [vmem:[%s2201 + $0x10] sm:$0xf] %v2188
            %2207 = vst [vmem:[%s2201 + $0x14] sm:$0xf] %v2189
            %2208 = vst [vmem:[%s2201 + $0x18] sm:$0xf] %v2190
            %2209 = vst [vmem:[%s2201 + $0x1c] sm:$0xf] %v2191
            %2210 = vst [vmem:[%s2201 + $0x20] sm:$0xf] %v2192
            %2211 = vst [vmem:[%s2201 + $0x24] sm:$0xf] %v2193
            %2212 = vst [vmem:[%s2201 + $0x28] sm:$0xf] %v2194
            %2213 = vst [vmem:[%s2201 + $0x2c] sm:$0xf] %v2195
            %2214 = vst [vmem:[%s2201 + $0x30] sm:$0xf] %v2196
            %2215 = vst [vmem:[%s2201 + $0x34] sm:$0xf] %v2197
            %2216 = vst [vmem:[%s2201 + $0x38] sm:$0xf] %v2198
            %2217 = vst [vmem:[%s2201 + $0x3c] sm:$0xf] %v2199
          $region84: #{graph_sage_forward.1} parent=79 // pred_fallthru
            _
          %p2218 = scmp.eq.s32.totalorder %s20, 2
          // Predicated region
          $region85: #{graph_sage_forward.1} parent=79 // pred_check
            %p2219 = pneg %p2218
          $region86: #{graph_sage_forward.1} parent=79 // pred_check_branch
            %2221 = sbr.rel (%p2219) target = $region88
          $region87: #{graph_sage_forward.1} parent=79 // pred_region
            %2222 = vst [vmem:[%s229] sm:$0xff] %v2148
            %2223 = vst [vmem:[%s229 + $0x8] sm:$0xff] %v2149
            %2224 = vst [vmem:[%s229 + $0x10] sm:$0xff] %v2150
            %2225 = vst [vmem:[%s229 + $0x18] sm:$0xff] %v2151
            %2226 = vst [vmem:[%s229 + $0x20] sm:$0xff] %v2152
            %2227 = vst [vmem:[%s229 + $0x28] sm:$0xff] %v2153
            %2228 = vst [vmem:[%s229 + $0x30] sm:$0xff] %v2154
            %2229 = vst [vmem:[%s229 + $0x38] sm:$0xff] %v2155
            %2230 = vst [vmem:[%s229 + $0x40] sm:$0xff] %v2156
            %2231 = vst [vmem:[%s229 + $0x48] sm:$0xff] %v2157
            %2232 = vst [vmem:[%s229 + $0x50] sm:$0xff] %v2158
            %2233 = vst [vmem:[%s229 + $0x58] sm:$0xff] %v2159
            %2234 = vst [vmem:[%s229 + $0x60] sm:$0xff] %v2160
            %2235 = vst [vmem:[%s229 + $0x68] sm:$0xff] %v2161
            %2236 = vst [vmem:[%s229 + $0x70] sm:$0xff] %v2162
            %2237 = vst [vmem:[%s229 + $0x78] sm:$0xff] %v2163
          $region88: #{graph_sage_forward.1} parent=79 // pred_fallthru
            _
        $region80: #{graph_sage_forward.1} parent=75 // pred_fallthru
          _
      $region76: #{graph_sage_forward.1} parent=35 // pred_fallthru
        _
      %s2238 = smul.u32 16, %s21
      %p2239 = scmp.lt.s32.totalorder %s2238, 15
      %s2240 = scalar_select %p2239, %s2238, 15
      %s2241 = smul.addr %s2240, 8
      %s2242 = scalar_lea.vmem %s4, %s2241
      // Predicated region
      $region89: #{graph_sage_forward.1} parent=35 // pred_check
        %p2243 = pneg %p143
      $region90: #{graph_sage_forward.1} parent=35 // pred_check_branch
        %2245 = sbr.rel (%p2243) target = $region92
      $region91: #{graph_sage_forward.1} parent=35 // pred_region
        %s2246 = smul.u32 16, %s21
      $region92: #{graph_sage_forward.1} parent=35 // pred_fallthru
        _
      // Predicated region
      $region93: #{graph_sage_forward.1} parent=35 // pred_check
        %p2247 = pneg %p143
      $region94: #{graph_sage_forward.1} parent=35 // pred_check_branch
        %2249 = sbr.rel (%p2247) target = $region96
      $region95: #{graph_sage_forward.1} parent=35 // pred_region
        %s2250 = smul.u32 16, %s21
        %p2251 = scmp.lt.s32.totalorder %s2250, 15
        %s2252 = scalar_select %p2251, %s2250, 15
        %s2253 = smul.addr %s2252, 8
        %s2254 = scalar_lea.vmem %s4, %s2253
      $region96: #{graph_sage_forward.1} parent=35 // pred_fallthru
        _
    $region36: #{graph_sage_forward.1} parent=5 // pred_fallthru
      _
    %p2255 = scmp.le.s32.totalorder 2, %s10
    // Predicated region
    $region97: #{graph_sage_forward.1} parent=5 // pred_check
      %p2256 = pneg %p2255
    $region98: #{graph_sage_forward.1} parent=5 // pred_check_branch
      %2258 = sbr.rel (%p2256) target = $region100
    $region99: #{graph_sage_forward.1} parent=5 // pred_region
      %s2259 = ssub.s32 %s10, 2
    $region100: #{graph_sage_forward.1} parent=5 // pred_fallthru
      _
  $region6: #{graph_sage_forward.1} parent=0 // loop_footer
    %s14 = sadd.s32 1, %s10
  $region7: #{graph_sage_forward.1} parent=0 // loop_footer_branch
    %9 = sbr.rel target = $region3
  $region8: #{graph_sage_forward.1} parent=0 // loop_exit
    _

</llo_original>
